<compile_context>
chip_gen: v5e
topology: v5e:2x2
jax: 0.10.0
libtpu: 0.0.40
codegen_flags: <defaults>
</compile_context>

<pallas_src>
import functools

import jax
import jax.numpy as jnp
from jax import lax
from jax.experimental import pallas as pl
from jax.experimental.pallas import tpu as pltpu


# ---------------------------------------------------------------------------------
# pass 1: GroupNorm statistics -> per-channel affine scale / shift
# ---------------------------------------------------------------------------------
def gn_stats_kernel(x_ref, gmap_ref, gn_g_ref, gn_b_ref, scale_ref, shift_ref,
                    *, eps, group_size):
    f32 = jnp.float32
    x = x_ref[0]                                          # (S, C) token-major, f32
    S = x.shape[0]
    gmap = gmap_ref[...]                                  # (C, G) one-hot channel->group
    inv_n = 1.0 / float(S * group_size)

    # token-axis reductions on the MXU (ones-row matmul) instead of long XLU sublane chains
    ones_row = jnp.ones((1, S), f32)
    chan_sum = jnp.dot(ones_row, x, preferred_element_type=f32)            # (1, C)
    g_mean = jnp.dot(chan_sum, gmap, preferred_element_type=f32) * inv_n   # (1, G)
    mean_c = lax.dot_general(g_mean, gmap, (((1,), (1,)), ((), ())),
                             preferred_element_type=f32)                   # (1, C)
    xc = x - mean_c                                                        # two-pass variance
    chan_sq = jnp.dot(ones_row, xc * xc, preferred_element_type=f32)       # (1, C)
    g_var = jnp.dot(chan_sq, gmap, preferred_element_type=f32) * inv_n     # (1, G)
    g_inv = lax.rsqrt(g_var + eps)
    inv_c = lax.dot_general(g_inv, gmap, (((1,), (1,)), ((), ())),
                            preferred_element_type=f32)                    # (1, C)
    scale = inv_c * gn_g_ref[...]
    scale_ref[0] = scale
    shift_ref[0] = gn_b_ref[...] - mean_c * scale


# ---------------------------------------------------------------------------------
# pass 2: GN affine + proj_in + LayerNorm1 + full-width Q/K/V projections (S-tiled)
# ---------------------------------------------------------------------------------
def proj_qkv_kernel(x_ref, scale_ref, shift_ref, w_in_ref, b_in_ref,
                    ln1_g_ref, ln1_b_ref, wq_ref, wk_ref, wv_ref,
                    h0_ref, q_ref, k_ref, v_ref, *, ln_eps):
    f32, bf16 = jnp.float32, jnp.bfloat16
    x = x_ref[0]                                          # (TS, C) f32
    xn = x * scale_ref[0] + shift_ref[0]                  # GroupNorm (stats folded to scale/shift)
    h0 = jnp.dot(xn.astype(bf16), w_in_ref[...],
                 preferred_element_type=f32) + b_in_ref[...]               # proj_in, (TS, D)
    h0_ref[0] = h0
    mu = jnp.mean(h0, axis=-1, keepdims=True)                              # LayerNorm1, f32 stats
    hc = h0 - mu
    var = jnp.mean(hc * hc, axis=-1, keepdims=True)
    h1 = (hc * (lax.rsqrt(var + ln_eps) * ln1_g_ref[...]) + ln1_b_ref[...]).astype(bf16)
    # full-width (TS,D)x(D,D) projections (MXU N=D, not per-head N=dh); scale folded into wq
    q_ref[0] = jnp.dot(h1, wq_ref[...], preferred_element_type=f32).astype(bf16)
    k_ref[0] = jnp.dot(h1, wk_ref[...], preferred_element_type=f32).astype(bf16)
    v_ref[0] = jnp.dot(h1, wv_ref[...], preferred_element_type=f32).astype(bf16)


# ---------------------------------------------------------------------------------
# pass 3: flash attention over kv tiles + to_out + LN2 + GEGLU FF + proj_out + residual
# ---------------------------------------------------------------------------------
def flash_attn_ff_kernel(q_ref, k_ref, v_ref, h0_ref, x_ref,
                         wo_ref, bo_ref, ln2_g_ref, ln2_b_ref,
                         w_ffv_ref, b_ffv_ref, w_ffg_ref, b_ffg_ref,
                         w_ff2_ref, b_ff2_ref, w_out_ref, b_out_ref,
                         o_ref, m_ref, l_ref, acc_ref,
                         *, n_heads, d_head, ln_eps):
    f32, bf16 = jnp.float32, jnp.bfloat16
    kv = pl.program_id(2)

    @pl.when(kv == 0)
    def _init():
        m_ref[...] = jnp.full(m_ref.shape, -jnp.inf, f32)
        l_ref[...] = jnp.zeros(l_ref.shape, f32)
        acc_ref[...] = jnp.zeros(acc_ref.shape, f32)

    q_t = q_ref[0]                                        # (TQ, D) bf16 (scale pre-folded)
    k_t = k_ref[0]                                        # (TK, D) bf16
    v_t = v_ref[0]                                        # (TK, D) bf16

    # online softmax, one head at a time; head slabs are static, 128-aligned lane slices.
    # TODO(synk): for n_heads >= 4 switch to a non-unrolled lax.fori_loop over heads.
    for h in range(n_heads):
        sl = slice(h * d_head, (h + 1) * d_head)
        sim = lax.dot_general(q_t[:, sl], k_t[:, sl], (((1,), (1,)), ((), ())),
                              preferred_element_type=f32)                  # (TQ, TK), NT form
        m_prev = m_ref[h]                                                  # (TQ, 1)
        m_new = jnp.maximum(m_prev, jnp.max(sim, axis=-1, keepdims=True))
        alpha = jnp.exp(m_prev - m_new)
        p = jnp.exp(sim - m_new)
        l_ref[h] = alpha * l_ref[h] + jnp.sum(p, axis=-1, keepdims=True)
        acc_ref[:, sl] = alpha * acc_ref[:, sl] + jnp.dot(
            p.astype(bf16), v_t[:, sl], preferred_element_type=f32)
        m_ref[h] = m_new

    @pl.when(kv == pl.num_programs(2) - 1)
    def _epilogue():
        # normalize each head slab in place, then ONE full-width (K=D) to_out matmul
        for h in range(n_heads):
            sl = slice(h * d_head, (h + 1) * d_head)
            acc_ref[:, sl] = acc_ref[:, sl] * pl.reciprocal(l_ref[h], approx=False)
        attn = acc_ref[...].astype(bf16)                                   # (TQ, D)
        xd = h0_ref[0] + jnp.dot(attn, wo_ref[...],
                                 preferred_element_type=f32) + bo_ref[...]
        # LayerNorm2
        mu = jnp.mean(xd, axis=-1, keepdims=True)
        xc = xd - mu
        var = jnp.mean(xc * xc, axis=-1, keepdims=True)
        h2 = (xc * (lax.rsqrt(var + ln_eps) * ln2_g_ref[...]) + ln2_b_ref[...]).astype(bf16)
        # GEGLU with split value/gate weights: no (TQ, 2F) buffer, no 2F-wide lane slices
        val = jnp.dot(h2, w_ffv_ref[...], preferred_element_type=f32) + b_ffv_ref[...]
        gate = jnp.dot(h2, w_ffg_ref[...], preferred_element_type=f32) + b_ffg_ref[...]
        # TODO(synk): PyTorch F.gelu default is the exact erf form; tanh approximation used here.
        ffh = (val * jax.nn.gelu(gate, approximate=True)).astype(bf16)
        xd = xd + jnp.dot(ffh, w_ff2_ref[...], preferred_element_type=f32) + b_ff2_ref[...]
        # proj_out + input residual (x block only read here; not held live through the kv loop)
        out = jnp.dot(xd.astype(bf16), w_out_ref[...],
                      preferred_element_type=f32) + b_out_ref[...]         # (TQ, C)
        o_ref[0] = x_ref[0] + out


# ---------------------------------------------------------------------------------
# wrapper
# ---------------------------------------------------------------------------------
def _spatial_transformer(x, params, *, n_heads, d_head, num_groups, gn_eps, ln_eps,
                         s_tile, q_tile, kv_tile, single_buffer_weights):
    B, C, S = x.shape
    D = n_heads * d_head
    F = params['w_ff2'].shape[1]
    G = num_groups
    f32, bf16 = jnp.float32, jnp.bfloat16

    assert C % G == 0, "GroupNorm requires channels divisible by num_groups"
    for t in (s_tile, q_tile, kv_tile):
        assert S % t == 0 and t % 8 == 0, "tiles must divide S and be multiples of 8"

    # single HBM transpose to token-major (lane-dense: last dim is C or D, >= 128 wide)
    x_tok = jnp.transpose(x, (0, 2, 1)).astype(f32)                        # (B, S, C)

    # PyTorch (out, in) weights -> (in, out); matmul weights cast to bf16 once (wrapper side)
    gmap = (jnp.arange(C)[:, None] // (C // G)
            == jnp.arange(G)[None, :]).astype(f32)                         # (C, G)
    w_in = params['w_in'].T.astype(bf16)                                   # (C, D)
    wq = (params['wq'].T * (d_head ** -0.5)).astype(bf16)                  # (D, D) scale folded
    wk = params['wk'].T.astype(bf16)
    wv = params['wv'].T.astype(bf16)
    wo = params['wo'].T.astype(bf16)                                       # (D, D)
    w_ffv = params['w_ff1'][:F].T.astype(bf16)                             # (D, F) GEGLU value
    w_ffg = params['w_ff1'][F:].T.astype(bf16)                             # (D, F) GEGLU gate
    w_ff2 = params['w_ff2'].T.astype(bf16)                                 # (F, D)
    w_out = params['w_out'].T.astype(bf16)                                 # (D, C)
    row = lambda v: v[None, :].astype(f32)
    b_ffv, b_ffg = row(params['b_ff1'][:F]), row(params['b_ff1'][F:])

    # grid-invariant weights: single VMEM copy (Buffered(1)) when supported by this JAX
    if single_buffer_weights:
        wspec = lambda shape, imap: pl.BlockSpec(shape, imap, pipeline_mode=pl.Buffered(1))
    else:
        wspec = lambda shape, imap: pl.BlockSpec(shape, imap)

    def mosaic(sem):
        return pltpu.CompilerParams(dimension_semantics=sem,
                                    vmem_limit_bytes=64 * 1024 * 1024)

    # ---- pass 1: GroupNorm stats (per batch) -> per-channel scale / shift -----------
    c1 = lambda shape: wspec(shape, lambda b: (0, 0))
    scale_c, shift_c = pl.pallas_call(
        functools.partial(gn_stats_kernel, eps=gn_eps, group_size=C // G),
        out_shape=(jax.ShapeDtypeStruct((B, 1, C), f32),
                   jax.ShapeDtypeStruct((B, 1, C), f32)),
        grid_spec=pltpu.PrefetchScalarGridSpec(
            num_scalar_prefetch=0, grid=(B,),
            in_specs=[pl.BlockSpec((1, S, C), lambda b: (b, 0, 0)),
                      c1((C, G)), c1((1, C)), c1((1, C))],
            out_specs=(pl.BlockSpec((1, 1, C), lambda b: (b, 0, 0)),
                       pl.BlockSpec((1, 1, C), lambda b: (b, 0, 0)))),
        compiler_params=mosaic(("parallel",)),
    )(x_tok, gmap, row(params['gn_g']), row(params['gn_b']))

    # ---- pass 2: GN affine + proj_in + LN1 + full-width Q/K/V projections (S-tiled) --
    c2 = lambda shape: wspec(shape, lambda b, s: (0, 0))
    per_b = lambda: pl.BlockSpec((1, 1, C), lambda b, s: (b, 0, 0))
    tok2 = lambda last: pl.BlockSpec((1, s_tile, last), lambda b, s: (b, s, 0))
    h0, q_all, k_all, v_all = pl.pallas_call(
        functools.partial(proj_qkv_kernel, ln_eps=ln_eps),
        out_shape=(jax.ShapeDtypeStruct((B, S, D), f32),
                   jax.ShapeDtypeStruct((B, S, D), bf16),
                   jax.ShapeDtypeStruct((B, S, D), bf16),
                   jax.ShapeDtypeStruct((B, S, D), bf16)),
        grid_spec=pltpu.PrefetchScalarGridSpec(
            num_scalar_prefetch=0, grid=(B, S // s_tile),
            in_specs=[tok2(C), per_b(), per_b(),
                      c2((C, D)), c2((1, D)), c2((1, D)), c2((1, D)),
                      c2((D, D)), c2((D, D)), c2((D, D))],
            out_specs=(tok2(D), tok2(D), tok2(D), tok2(D))),
        compiler_params=mosaic(("parallel", "parallel")),
    )(x_tok, scale_c, shift_c, w_in, row(params['b_in']),
      row(params['ln1_g']), row(params['ln1_b']), wq, wk, wv)

    # ---- pass 3: flash attention + to_out + GEGLU FF + proj_out + input residual -----
    c3 = lambda shape: wspec(shape, lambda b, qi, kv: (0, 0))
    qblk = lambda last: pl.BlockSpec((1, q_tile, last), lambda b, qi, kv: (b, qi, 0))
    kvblk = lambda: pl.BlockSpec((1, kv_tile, D), lambda b, qi, kv: (b, kv, 0))
    out_tok = pl.pallas_call(
        functools.partial(flash_attn_ff_kernel,
                          n_heads=n_heads, d_head=d_head, ln_eps=ln_eps),
        out_shape=jax.ShapeDtypeStruct((B, S, C), f32),
        grid_spec=pltpu.PrefetchScalarGridSpec(
            num_scalar_prefetch=0, grid=(B, S // q_tile, S // kv_tile),
            in_specs=[qblk(D), kvblk(), kvblk(), qblk(D), qblk(C),
                      c3((D, D)), c3((1, D)), c3((1, D)), c3((1, D)),
                      c3((D, F)), c3((1, F)), c3((D, F)), c3((1, F)),
                      c3((F, D)), c3((1, D)), c3((D, C)), c3((1, C))],
            out_specs=qblk(C),
            scratch_shapes=[pltpu.VMEM((n_heads, q_tile, 1), f32),    # running max per head
                            pltpu.VMEM((n_heads, q_tile, 1), f32),    # running denom per head
                            pltpu.VMEM((q_tile, D), f32)]),           # output accumulator
        compiler_params=mosaic(("parallel", "parallel", "arbitrary")),
    )(q_all, k_all, v_all, h0, x_tok,
      wo, row(params['bo']), row(params['ln2_g']), row(params['ln2_b']),
      w_ffv, b_ffv, w_ffg, b_ffg, w_ff2, row(params['b_ff2']),
      w_out, row(params['b_out']))

    return jnp.transpose(out_tok, (0, 2, 1))                              # back to (B, C, S)


def spatial_transformer(x, params, *, n_heads, d_head, num_groups=32,
                        gn_eps=1e-6, ln_eps=1e-5, s_tile=None, q_tile=None, kv_tile=None):
    """x: (B, C, S) float32 (PyTorch NCL convention). Returns (B, C, S)."""
    S = x.shape[2]
    s_tile = min(S, 128) if s_tile is None else s_tile
    q_tile = min(S, 128) if q_tile is None else q_tile
    kv_tile = min(S, 128) if kv_tile is None else kv_tile
    kwargs = dict(n_heads=n_heads, d_head=d_head, num_groups=num_groups, gn_eps=gn_eps,
                  ln_eps=ln_eps, s_tile=s_tile, q_tile=q_tile, kv_tile=kv_tile)
    try:
        return _spatial_transformer(x, params, single_buffer_weights=True, **kwargs)
    except Exception:
        # pipeline_mode=pl.Buffered(1) rejected by this JAX/Mosaic version: fall back to
        # default double-buffered weight blocks (identical semantics, slightly more VMEM).
        return _spatial_transformer(x, params, single_buffer_weights=False, **kwargs)


# ---------------------------------------------------------------------------------
# pure-JAX f32 reference (mirror of the PyTorch forward) for checking
# ---------------------------------------------------------------------------------
def spatial_transformer_reference(x, params, *, n_heads, d_head, num_groups=32,
                                  gn_eps=1e-6, ln_eps=1e-5):
    B, C, S = x.shape
    D = n_heads * d_head
    F = params['w_ff2'].shape[1]

    gs = C // num_groups
    xg = x.reshape(B, num_groups, gs, S)
    mean = xg.mean(axis=(2, 3), keepdims=True)
    var = ((xg - mean) ** 2).mean(axis=(2, 3), keepdims=True)
    xn = ((xg - mean) / jnp.sqrt(var + gn_eps)).reshape(B, C, S)
    xn = xn * params['gn_g'][None, :, None] + params['gn_b'][None, :, None]

    h = jnp.einsum('oc,bcs->bso', params['w_in'], xn) + params['b_in'][None, None, :]

    def layer_norm(t, g, b):
        mu = t.mean(-1, keepdims=True)
        tc = t - mu
        v_ = (tc * tc).mean(-1, keepdims=True)
        return tc / jnp.sqrt(v_ + ln_eps) * g + b

    h1 = layer_norm(h, params['ln1_g'], params['ln1_b'])
    q = jnp.einsum('bsd,od->bso', h1, params['wq'])
    k = jnp.einsum('bsd,od->bso', h1, params['wk'])
    v = jnp.einsum('bsd,od->bso', h1, params['wv'])
    split = lambda t: t.reshape(B, S, n_heads, d_head).transpose(0, 2, 1, 3)
    qh, kh, vh = split(q), split(k), split(v)
    sim = jnp.einsum('bhid,bhjd->bhij', qh, kh) * (d_head ** -0.5)
    attn = jax.nn.softmax(sim.astype(jnp.float32), axis=-1)
    o = jnp.einsum('bhij,bhjd->bhid', attn, vh)
    o = o.transpose(0, 2, 1, 3).reshape(B, S, D)
    o = jnp.einsum('bsd,od->bso', o, params['wo']) + params['bo'][None, None, :]
    h = h + o

    h2 = layer_norm(h, params['ln2_g'], params['ln2_b'])
    g12 = jnp.einsum('bsd,od->bso', h2, params['w_ff1']) + params['b_ff1'][None, None, :]
    ffh = g12[..., :F] * jax.nn.gelu(g12[..., F:], approximate=True)
    ff = jnp.einsum('bsf,of->bso', ffh, params['w_ff2']) + params['b_ff2'][None, None, :]
    h = h + ff

    out = jnp.einsum('od,bsd->bos', params['w_out'], h) + params['b_out'][None, :, None]
    return x + out


if __name__ == "__main__":
    # Small shapes consistent with the module: channels divisible by 32 (GroupNorm);
    # d_head=128 keeps head slabs lane-aligned; S=128 with 64-wide tiles exercises both
    # the q-tile grid axis and the online-softmax accumulation across kv tiles.
    B, C, S = 2, 128, 128
    N_HEADS, D_HEAD = 2, 128
    D = N_HEADS * D_HEAD            # inner_dim = 256
    F = 4 * D                       # FF inner = 1024 (GEGLU proj -> 2F)

    key = jax.random.PRNGKey(0)
    keys = jax.random.split(key, 20)
    rnd = lambda k, shape, s=0.05: s * jax.random.normal(k, shape, dtype=jnp.float32)

    x = jax.random.normal(keys[0], (B, C, S), dtype=jnp.float32)

    params = dict(
        gn_g=1.0 + rnd(keys[1], (C,), 0.1), gn_b=rnd(keys[2], (C,), 0.1),
        w_in=rnd(keys[3], (D, C)), b_in=rnd(keys[4], (D,)),              # Conv1d(C, D, 1)
        ln1_g=1.0 + rnd(keys[5], (D,), 0.1), ln1_b=rnd(keys[6], (D,), 0.1),
        wq=rnd(keys[7], (D, D)), wk=rnd(keys[8], (D, D)), wv=rnd(keys[9], (D, D)),
        wo=rnd(keys[10], (D, D)), bo=rnd(keys[11], (D,)),                # to_out[0]
        ln2_g=1.0 + rnd(keys[12], (D,), 0.1), ln2_b=rnd(keys[13], (D,), 0.1),
        w_ff1=rnd(keys[14], (2 * F, D)), b_ff1=rnd(keys[15], (2 * F,)),  # GEGLU proj
        w_ff2=rnd(keys[16], (D, F)), b_ff2=rnd(keys[17], (D,)),          # FF out Linear
        # proj_out is zero_module() in the original; random here so compute is exercised.
        w_out=rnd(keys[18], (C, D)), b_out=rnd(keys[19], (C,)),          # Conv1d(D, C, 1)
    )

    out = spatial_transformer(x, params, n_heads=N_HEADS, d_head=D_HEAD,
                              s_tile=64, q_tile=64, kv_tile=64)
    out = jax.block_until_ready(out)
    ref = jax.block_until_ready(
        spatial_transformer_reference(x, params, n_heads=N_HEADS, d_head=D_HEAD))

    assert out.shape == (B, C, S)
    # tolerance reflects bf16 MXU operands (f32 accumulation)
    if not jnp.allclose(out, ref, atol=5e-2, rtol=5e-2):
        max_err = float(jnp.max(jnp.abs(out - ref)))
        raise AssertionError(f"Pallas kernel does not match reference (max abs err {max_err})")

    print("KERNEL_OK")
</pallas_src>

<mosaic_0001>
module attributes {stable_mosaic.version = 11 : i64} {
  func.func @gn_stats_kernel(%arg0: i32, %arg1: memref<1x128x128xf32, #tpu.memory_space<vmem>>, %arg2: memref<128x32xf32, #tpu.memory_space<vmem>>, %arg3: memref<1x128xf32, #tpu.memory_space<vmem>>, %arg4: memref<1x128xf32, #tpu.memory_space<vmem>>, %arg5: memref<1x1x128xf32, #tpu.memory_space<vmem>>, %arg6: memref<1x1x128xf32, #tpu.memory_space<vmem>>) attributes {dimension_semantics = [#tpu.dimension_semantics<parallel>], iteration_bounds = array<i64: 2>, scalar_prefetch = 0 : i64, scratch_operands = 0 : i64, tpu.core_type = #tpu.core_type<tc>, window_params = [{transform_indices = @transform_0, window_bounds = array<i64: 1, 128, 128>}, {pipeline_mode = #tpu.pipeline_mode<synchronous>, transform_indices = @transform_1, window_bounds = array<i64: 128, 32>}, {pipeline_mode = #tpu.pipeline_mode<synchronous>, transform_indices = @transform_2, window_bounds = array<i64: 1, 128>}, {pipeline_mode = #tpu.pipeline_mode<synchronous>, transform_indices = @transform_3, window_bounds = array<i64: 1, 128>}, {transform_indices = @transform_4, window_bounds = array<i64: 1, 1, 128>}, {transform_indices = @transform_5, window_bounds = array<i64: 1, 1, 128>}]} {
    %c0 = arith.constant 0 : index
    %c0_0 = arith.constant 0 : index
    %c0_1 = arith.constant 0 : index
    %0 = vector.load %arg1[%c0, %c0_0, %c0_1] : memref<1x128x128xf32, #tpu.memory_space<vmem>>, vector<1x128x128xf32>
    %1 = vector.shape_cast %0 : vector<1x128x128xf32> to vector<128x128xf32>
    %c0_2 = arith.constant 0 : index
    %c0_3 = arith.constant 0 : index
    %2 = vector.load %arg2[%c0_2, %c0_3] : memref<128x32xf32, #tpu.memory_space<vmem>>, vector<128x32xf32>
    %cst = arith.constant 1.000000e+00 : f32
    %3 = vector.broadcast %cst : f32 to vector<1x128xf32>
    %cst_4 = arith.constant dense<0.000000e+00> : vector<1x128xf32>
    %4 = tpu.matmul %3, %1, %cst_4 {dimension_numbers = #tpu.dot_dimension_numbers<[1], [0], [0], [1], [0, 0, 1, 1], [], []>} : vector<1x128xf32>, vector<128x128xf32>, vector<1x128xf32> -> vector<1x128xf32>
    %cst_5 = arith.constant dense<0.000000e+00> : vector<1x32xf32>
    %5 = tpu.matmul %4, %2, %cst_5 {dimension_numbers = #tpu.dot_dimension_numbers<[1], [0], [0], [1], [0, 0, 1, 1], [], []>} : vector<1x128xf32>, vector<128x32xf32>, vector<1x32xf32> -> vector<1x32xf32>
    %cst_6 = arith.constant 0.001953125 : f32
    %6 = vector.broadcast %cst_6 : f32 to vector<1x32xf32>
    %7 = arith.mulf %5, %6 : vector<1x32xf32>
    %cst_7 = arith.constant dense<0.000000e+00> : vector<1x128xf32>
    %8 = tpu.matmul %7, %2, %cst_7 {dimension_numbers = #tpu.dot_dimension_numbers<[1], [1], [0], [0], [0, 0, 1, 0], [], []>} : vector<1x32xf32>, vector<128x32xf32>, vector<1x128xf32> -> vector<1x128xf32>
    %9 = vector.broadcast %8 : vector<1x128xf32> to vector<128x128xf32>
    %10 = arith.subf %1, %9 : vector<128x128xf32>
    %11 = arith.mulf %10, %10 : vector<128x128xf32>
    %cst_8 = arith.constant dense<0.000000e+00> : vector<1x128xf32>
    %12 = tpu.matmul %3, %11, %cst_8 {dimension_numbers = #tpu.dot_dimension_numbers<[1], [0], [0], [1], [0, 0, 1, 1], [], []>} : vector<1x128xf32>, vector<128x128xf32>, vector<1x128xf32> -> vector<1x128xf32>
    %cst_9 = arith.constant dense<0.000000e+00> : vector<1x32xf32>
    %13 = tpu.matmul %12, %2, %cst_9 {dimension_numbers = #tpu.dot_dimension_numbers<[1], [0], [0], [1], [0, 0, 1, 1], [], []>} : vector<1x128xf32>, vector<128x32xf32>, vector<1x32xf32> -> vector<1x32xf32>
    %cst_10 = arith.constant 0.001953125 : f32
    %14 = vector.broadcast %cst_10 : f32 to vector<1x32xf32>
    %15 = arith.mulf %13, %14 : vector<1x32xf32>
    %cst_11 = arith.constant 9.99999997E-7 : f32
    %16 = vector.broadcast %cst_11 : f32 to vector<1x32xf32>
    %17 = arith.addf %15, %16 : vector<1x32xf32>
    %18 = math.rsqrt %17 : vector<1x32xf32>
    %cst_12 = arith.constant dense<0.000000e+00> : vector<1x128xf32>
    %19 = tpu.matmul %18, %2, %cst_12 {dimension_numbers = #tpu.dot_dimension_numbers<[1], [1], [0], [0], [0, 0, 1, 0], [], []>} : vector<1x32xf32>, vector<128x32xf32>, vector<1x128xf32> -> vector<1x128xf32>
    %c0_13 = arith.constant 0 : index
    %c0_14 = arith.constant 0 : index
    %20 = vector.load %arg3[%c0_13, %c0_14] : memref<1x128xf32, #tpu.memory_space<vmem>>, vector<1x128xf32>
    %21 = arith.mulf %19, %20 : vector<1x128xf32>
    %c0_15 = arith.constant 0 : index
    %c0_16 = arith.constant 0 : index
    %c0_17 = arith.constant 0 : index
    %22 = vector.load %arg5[%c0_15, %c0_16, %c0_17] : memref<1x1x128xf32, #tpu.memory_space<vmem>>, vector<1x1x128xf32>
    %23 = vector.shape_cast %22 : vector<1x1x128xf32> to vector<1x128xf32>
    %24 = vector.shape_cast %21 : vector<1x128xf32> to vector<1x1x128xf32>
    tpu.vector_store %arg5[%c0_15, %c0_16, %c0_17], %24 {strides = array<i32>} : memref<1x1x128xf32, #tpu.memory_space<vmem>>, vector<1x1x128xf32>,
    %c0_18 = arith.constant 0 : index
    %c0_19 = arith.constant 0 : index
    %25 = vector.load %arg4[%c0_18, %c0_19] : memref<1x128xf32, #tpu.memory_space<vmem>>, vector<1x128xf32>
    %26 = arith.mulf %8, %21 : vector<1x128xf32>
    %27 = arith.subf %25, %26 : vector<1x128xf32>
    %c0_20 = arith.constant 0 : index
    %c0_21 = arith.constant 0 : index
    %c0_22 = arith.constant 0 : index
    %28 = vector.load %arg6[%c0_20, %c0_21, %c0_22] : memref<1x1x128xf32, #tpu.memory_space<vmem>>, vector<1x1x128xf32>
    %29 = vector.shape_cast %28 : vector<1x1x128xf32> to vector<1x128xf32>
    %30 = vector.shape_cast %27 : vector<1x128xf32> to vector<1x1x128xf32>
    tpu.vector_store %arg6[%c0_20, %c0_21, %c0_22], %30 {strides = array<i32>} : memref<1x1x128xf32, #tpu.memory_space<vmem>>, vector<1x1x128xf32>,
    return
  }
  func.func @transform_0(%arg0: i32) -> (i32, i32, i32) {
    %c0_i32 = arith.constant 0 : i32
    %c0_i32_0 = arith.constant 0 : i32
    %c0_i32_1 = arith.constant 0 : i32
    return %arg0, %c0_i32, %c0_i32_0 : i32, i32, i32
  }
  func.func @transform_1(%arg0: i32) -> (i32, i32) {
    %c0_i32 = arith.constant 0 : i32
    %c0_i32_0 = arith.constant 0 : i32
    %c0_i32_1 = arith.constant 0 : i32
    return %c0_i32, %c0_i32_0 : i32, i32
  }
  func.func @transform_2(%arg0: i32) -> (i32, i32) {
    %c0_i32 = arith.constant 0 : i32
    %c0_i32_0 = arith.constant 0 : i32
    %c0_i32_1 = arith.constant 0 : i32
    return %c0_i32, %c0_i32_0 : i32, i32
  }
  func.func @transform_3(%arg0: i32) -> (i32, i32) {
    %c0_i32 = arith.constant 0 : i32
    %c0_i32_0 = arith.constant 0 : i32
    %c0_i32_1 = arith.constant 0 : i32
    return %c0_i32, %c0_i32_0 : i32, i32
  }
  func.func @transform_4(%arg0: i32) -> (i32, i32, i32) {
    %c0_i32 = arith.constant 0 : i32
    %c0_i32_0 = arith.constant 0 : i32
    %c0_i32_1 = arith.constant 0 : i32
    return %arg0, %c0_i32, %c0_i32_0 : i32, i32, i32
  }
  func.func @transform_5(%arg0: i32) -> (i32, i32, i32) {
    %c0_i32 = arith.constant 0 : i32
    %c0_i32_0 = arith.constant 0 : i32
    %c0_i32_1 = arith.constant 0 : i32
    return %arg0, %c0_i32, %c0_i32_0 : i32, i32, i32
  }
}

module attributes {stable_mosaic.version = 11 : i64} {
  func.func @gn_stats_kernel(%arg0: i32, %arg1: memref<1x128x128xf32, #tpu.memory_space<vmem>>, %arg2: memref<128x32xf32, #tpu.memory_space<vmem>>, %arg3: memref<1x128xf32, #tpu.memory_space<vmem>>, %arg4: memref<1x128xf32, #tpu.memory_space<vmem>>, %arg5: memref<1x1x128xf32, #tpu.memory_space<vmem>>, %arg6: memref<1x1x128xf32, #tpu.memory_space<vmem>>) attributes {dimension_semantics = [#tpu.dimension_semantics<parallel>], iteration_bounds = array<i64: 2>, scalar_prefetch = 0 : i64, scratch_operands = 0 : i64, tpu.core_type = #tpu.core_type<tc>, window_params = [{transform_indices = @transform_0, window_bounds = array<i64: 1, 128, 128>}, {pipeline_mode = #tpu.pipeline_mode<synchronous>, transform_indices = @transform_1, window_bounds = array<i64: 128, 32>}, {pipeline_mode = #tpu.pipeline_mode<synchronous>, transform_indices = @transform_2, window_bounds = array<i64: 1, 128>}, {pipeline_mode = #tpu.pipeline_mode<synchronous>, transform_indices = @transform_3, window_bounds = array<i64: 1, 128>}, {transform_indices = @transform_4, window_bounds = array<i64: 1, 1, 128>}, {transform_indices = @transform_5, window_bounds = array<i64: 1, 1, 128>}]} {
    %c0 = arith.constant 0 : index
    %c0_0 = arith.constant 0 : index
    %c0_1 = arith.constant 0 : index
    %0 = vector.load %arg1[%c0, %c0_0, %c0_1] : memref<1x128x128xf32, #tpu.memory_space<vmem>>, vector<1x128x128xf32>
    %1 = vector.shape_cast %0 : vector<1x128x128xf32> to vector<128x128xf32>
    %c0_2 = arith.constant 0 : index
    %c0_3 = arith.constant 0 : index
    %2 = vector.load %arg2[%c0_2, %c0_3] : memref<128x32xf32, #tpu.memory_space<vmem>>, vector<128x32xf32>
    %cst = arith.constant 1.000000e+00 : f32
    %3 = vector.broadcast %cst : f32 to vector<1x128xf32>
    %cst_4 = arith.constant dense<0.000000e+00> : vector<1x128xf32>
    %4 = tpu.matmul %3, %1, %cst_4 {dimension_numbers = #tpu.dot_dimension_numbers<[1], [0], [0], [1], [0, 0, 1, 1], [], []>} : vector<1x128xf32>, vector<128x128xf32>, vector<1x128xf32> -> vector<1x128xf32>
    %cst_5 = arith.constant dense<0.000000e+00> : vector<1x32xf32>
    %5 = tpu.matmul %4, %2, %cst_5 {dimension_numbers = #tpu.dot_dimension_numbers<[1], [0], [0], [1], [0, 0, 1, 1], [], []>} : vector<1x128xf32>, vector<128x32xf32>, vector<1x32xf32> -> vector<1x32xf32>
    %cst_6 = arith.constant 0.001953125 : f32
    %6 = vector.broadcast %cst_6 : f32 to vector<1x32xf32>
    %7 = arith.mulf %5, %6 : vector<1x32xf32>
    %cst_7 = arith.constant dense<0.000000e+00> : vector<1x128xf32>
    %8 = tpu.matmul %7, %2, %cst_7 {dimension_numbers = #tpu.dot_dimension_numbers<[1], [1], [0], [0], [0, 0, 1, 0], [], []>} : vector<1x32xf32>, vector<128x32xf32>, vector<1x128xf32> -> vector<1x128xf32>
    %9 = vector.broadcast %8 : vector<1x128xf32> to vector<128x128xf32>
    %10 = arith.subf %1, %9 : vector<128x128xf32>
    %11 = arith.mulf %10, %10 : vector<128x128xf32>
    %cst_8 = arith.constant dense<0.000000e+00> : vector<1x128xf32>
    %12 = tpu.matmul %3, %11, %cst_8 {dimension_numbers = #tpu.dot_dimension_numbers<[1], [0], [0], [1], [0, 0, 1, 1], [], []>} : vector<1x128xf32>, vector<128x128xf32>, vector<1x128xf32> -> vector<1x128xf32>
    %cst_9 = arith.constant dense<0.000000e+00> : vector<1x32xf32>
    %13 = tpu.matmul %12, %2, %cst_9 {dimension_numbers = #tpu.dot_dimension_numbers<[1], [0], [0], [1], [0, 0, 1, 1], [], []>} : vector<1x128xf32>, vector<128x32xf32>, vector<1x32xf32> -> vector<1x32xf32>
    %cst_10 = arith.constant 0.001953125 : f32
    %14 = vector.broadcast %cst_10 : f32 to vector<1x32xf32>
    %15 = arith.mulf %13, %14 : vector<1x32xf32>
    %cst_11 = arith.constant 9.99999997E-7 : f32
    %16 = vector.broadcast %cst_11 : f32 to vector<1x32xf32>
    %17 = arith.addf %15, %16 : vector<1x32xf32>
    %18 = math.rsqrt %17 : vector<1x32xf32>
    %cst_12 = arith.constant dense<0.000000e+00> : vector<1x128xf32>
    %19 = tpu.matmul %18, %2, %cst_12 {dimension_numbers = #tpu.dot_dimension_numbers<[1], [1], [0], [0], [0, 0, 1, 0], [], []>} : vector<1x32xf32>, vector<128x32xf32>, vector<1x128xf32> -> vector<1x128xf32>
    %c0_13 = arith.constant 0 : index
    %c0_14 = arith.constant 0 : index
    %20 = vector.load %arg3[%c0_13, %c0_14] : memref<1x128xf32, #tpu.memory_space<vmem>>, vector<1x128xf32>
    %21 = arith.mulf %19, %20 : vector<1x128xf32>
    %c0_15 = arith.constant 0 : index
    %c0_16 = arith.constant 0 : index
    %c0_17 = arith.constant 0 : index
    %22 = vector.load %arg5[%c0_15, %c0_16, %c0_17] : memref<1x1x128xf32, #tpu.memory_space<vmem>>, vector<1x1x128xf32>
    %23 = vector.shape_cast %22 : vector<1x1x128xf32> to vector<1x128xf32>
    %24 = vector.shape_cast %21 : vector<1x128xf32> to vector<1x1x128xf32>
    tpu.vector_store %arg5[%c0_15, %c0_16, %c0_17], %24 {strides = array<i32>} : memref<1x1x128xf32, #tpu.memory_space<vmem>>, vector<1x1x128xf32>,
    %c0_18 = arith.constant 0 : index
    %c0_19 = arith.constant 0 : index
    %25 = vector.load %arg4[%c0_18, %c0_19] : memref<1x128xf32, #tpu.memory_space<vmem>>, vector<1x128xf32>
    %26 = arith.mulf %8, %21 : vector<1x128xf32>
    %27 = arith.subf %25, %26 : vector<1x128xf32>
    %c0_20 = arith.constant 0 : index
    %c0_21 = arith.constant 0 : index
    %c0_22 = arith.constant 0 : index
    %28 = vector.load %arg6[%c0_20, %c0_21, %c0_22] : memref<1x1x128xf32, #tpu.memory_space<vmem>>, vector<1x1x128xf32>
    %29 = vector.shape_cast %28 : vector<1x1x128xf32> to vector<1x128xf32>
    %30 = vector.shape_cast %27 : vector<1x128xf32> to vector<1x1x128xf32>
    tpu.vector_store %arg6[%c0_20, %c0_21, %c0_22], %30 {strides = array<i32>} : memref<1x1x128xf32, #tpu.memory_space<vmem>>, vector<1x1x128xf32>,
    return
  }
  func.func @transform_0(%arg0: i32) -> (i32, i32, i32) {
    %c0_i32 = arith.constant 0 : i32
    %c0_i32_0 = arith.constant 0 : i32
    %c0_i32_1 = arith.constant 0 : i32
    return %arg0, %c0_i32, %c0_i32_0 : i32, i32, i32
  }
  func.func @transform_1(%arg0: i32) -> (i32, i32) {
    %c0_i32 = arith.constant 0 : i32
    %c0_i32_0 = arith.constant 0 : i32
    %c0_i32_1 = arith.constant 0 : i32
    return %c0_i32, %c0_i32_0 : i32, i32
  }
  func.func @transform_2(%arg0: i32) -> (i32, i32) {
    %c0_i32 = arith.constant 0 : i32
    %c0_i32_0 = arith.constant 0 : i32
    %c0_i32_1 = arith.constant 0 : i32
    return %c0_i32, %c0_i32_0 : i32, i32
  }
  func.func @transform_3(%arg0: i32) -> (i32, i32) {
    %c0_i32 = arith.constant 0 : i32
    %c0_i32_0 = arith.constant 0 : i32
    %c0_i32_1 = arith.constant 0 : i32
    return %c0_i32, %c0_i32_0 : i32, i32
  }
  func.func @transform_4(%arg0: i32) -> (i32, i32, i32) {
    %c0_i32 = arith.constant 0 : i32
    %c0_i32_0 = arith.constant 0 : i32
    %c0_i32_1 = arith.constant 0 : i32
    return %arg0, %c0_i32, %c0_i32_0 : i32, i32, i32
  }
  func.func @transform_5(%arg0: i32) -> (i32, i32, i32) {
    %c0_i32 = arith.constant 0 : i32
    %c0_i32_0 = arith.constant 0 : i32
    %c0_i32_1 = arith.constant 0 : i32
    return %arg0, %c0_i32, %c0_i32_0 : i32, i32, i32
  }
}

</mosaic_0001>

<llo_original>
// kernel: tpu_custom_call.1
$region0: #{tpu_custom_call.1}
  #allocation0 [shape = 'u32[]', space=smem, size = 0x4, offset = 0x4, fixed_abs, tag = 'smem constant byte address 0x4 - core index']
  #allocation1 [shape = 'u32[72,128]{1,0:T(1,128)}', space=vmem, size = 0x9000, scoped, tag = 'internal scratch']
  %s0 = inlined_call_operand.hbm [shape: f32[2,128,128], index: 0, kind: input, shape index: {}]
  %s1 = inlined_call_operand.vmem [shape: f32[128,32], index: 1, kind: input, shape index: {}]
  %s2 = inlined_call_operand.vmem [shape: f32[1,128], index: 2, kind: input, shape index: {}]
  %s3 = inlined_call_operand.vmem [shape: f32[1,128], index: 3, kind: input, shape index: {}]
  %s4 = inlined_call_operand.hbm [shape: f32[2,1,128], index: 4, kind: output, shape index: {0}]
  %s5 = inlined_call_operand.hbm [shape: f32[2,1,128], index: 5, kind: output, shape index: {1}]
  %6 = xla_tuple %s4, %s5
  %s7 = sld [smem:[#allocation0]]
  $region61: #{tpu_custom_call.1} parent=0
    _
  %s9 = ssub.s32 1, %s7
  %s10 = scalar_select 0, %s9, %s7
  $region1: #{tpu_custom_call.1} parent=0
    #allocation2 [shape = 'u8[131072]{0}', space=vmem, size = 0x20000, scoped, tag = 'input window, operand 0']
    #allocation3 [shape = 's32[2]{0}', space=sflag, size = 0x8, scoped, tag = 'scoped memory for tpu_custom_call.1']
    #allocation4 [shape = 's32[2]{0}', space=sflag, size = 0x8, scoped, tag = 'scoped memory for tpu_custom_call.1']
    #allocation5 [shape = 'u8[1024]{0}', space=vmem, size = 0x400, scoped, tag = 'output window, operand 0']
    #allocation6 [shape = 'u8[1024]{0}', space=vmem, size = 0x400, scoped, tag = 'output window, operand 1']
    #allocation7 [shape = 's32[2]{0}', space=sflag, size = 0x8, scoped, tag = 'scoped memory for tpu_custom_call.1']
    %11 = vsyncpa [#allocation3], 0
    %s12 = scalar_lea.sflag [#allocation3], 1
    %13 = vsyncpa %s12, 0
    %14 = vsyncpa [#allocation4], 0
    %s15 = scalar_lea.sflag [#allocation4], 1
    %16 = vsyncpa %s15, 0
    %17 = vsyncpa [#allocation7], 0
    %s18 = scalar_lea.sflag [#allocation7], 1
    %19 = vsyncpa %s18, 0
    loop: start=0, step=1, limit=4
    $region2: #{tpu_custom_call.1} parent=1 // loop_pre_header
      _
    $region3: #{tpu_custom_call.1} parent=1 // loop_header
      %s21 = sphi 0, %s25
      %p22 = scmp.ge.s32.totalorder %s21, 4
      %s31 = sphi 0, %s33
      %s34 = sphi 0, %s31
      %s35 = sphi 0, %s34
      %s51 = sphi 0, %s35
      %s55 = sphi 0, %s55
      %s57 = sphi 0, %s55
      %s58 = sphi 0, %s57
      %s72 = sphi 0, %s58
      %s76 = sphi 0, %s76
      %s78 = sphi 0, %s76
      %s79 = sphi 0, %s78
      %s93 = sphi 0, %s79
      %s97 = sphi 0, %s97
      %s99 = sphi 0, %s97
      %s100 = sphi 0, %s99
      %s114 = sphi 0, %s100
      %s120 = sphi 0, %s122
      %s123 = sphi 0, %s120
      %s124 = sphi 0, %s123
      %s140 = sphi 0, %s124
      %s146 = sphi 0, %s148
      %s149 = sphi 0, %s146
      %s150 = sphi 0, %s149
      %s166 = sphi 0, %s150
    $region4: #{tpu_custom_call.1} parent=1 // loop_header_branch
      %24 = sbr.rel (%p22) target = $region8
    $region5: #{tpu_custom_call.1} parent=1 // loop_body
      %s26 = ssub.s32 %s21, 1
      %s27 = ssub.s32 %s21, 2
      %s28 = sadd.s32 %s21, 1
      %s29 = ssub.s32 %s21, %s28
      %p30 = scmp.eq.s32.totalorder %s29, 0
      %s32 = sadd.s32 %s31, 1
      %s33 = scalar_select %p30, %s31, %s32
      %p36 = pneg %p30
      %p37 = scmp.eq.s32.totalorder %s21, 1
      %p38 = por %p36, %p37
      %p39 = scmp.ne.s32.totalorder %s31, %s34
      %p40 = scmp.eq.s32.totalorder %s21, 0
      %p41 = por %p39, %p40
      %p42 = scmp.ne.s32.totalorder %s31, %s34
      %p43 = scmp.eq.s32.totalorder %s26, 1
      %p44 = por %p42, %p43
      %p45 = scmp.ne.s32.totalorder %s34, %s35
      %p46 = scmp.eq.s32.totalorder %s26, 0
      %p47 = por %p45, %p46
      %p48 = scmp.ne.s32.totalorder %s34, %s35
      %p49 = scmp.eq.s32.totalorder %s27, 1
      %p50 = por %p48, %p49
      %p52 = scmp.ne.s32.totalorder %s35, %s51
      %p53 = scmp.eq.s32.totalorder %s27, 0
      %p54 = por %p52, %p53
      %s56 = sadd.s32 %s55, 1
      %p59 = scmp.eq.s32.totalorder %s21, 1
      %p60 = scmp.ne.s32.totalorder %s55, %s57
      %p61 = scmp.eq.s32.totalorder %s21, 0
      %p62 = por %p60, %p61
      %p63 = scmp.ne.s32.totalorder %s55, %s57
      %p64 = scmp.eq.s32.totalorder %s26, 1
      %p65 = por %p63, %p64
      %p66 = scmp.ne.s32.totalorder %s57, %s58
      %p67 = scmp.eq.s32.totalorder %s26, 0
      %p68 = por %p66, %p67
      %p69 = scmp.ne.s32.totalorder %s57, %s58
      %p70 = scmp.eq.s32.totalorder %s27, 1
      %p71 = por %p69, %p70
      %p73 = scmp.ne.s32.totalorder %s58, %s72
      %p74 = scmp.eq.s32.totalorder %s27, 0
      %p75 = por %p73, %p74
      %s77 = sadd.s32 %s76, 1
      %p80 = scmp.eq.s32.totalorder %s21, 1
      %p81 = scmp.ne.s32.totalorder %s76, %s78
      %p82 = scmp.eq.s32.totalorder %s21, 0
      %p83 = por %p81, %p82
      %p84 = scmp.ne.s32.totalorder %s76, %s78
      %p85 = scmp.eq.s32.totalorder %s26, 1
      %p86 = por %p84, %p85
      %p87 = scmp.ne.s32.totalorder %s78, %s79
      %p88 = scmp.eq.s32.totalorder %s26, 0
      %p89 = por %p87, %p88
      %p90 = scmp.ne.s32.totalorder %s78, %s79
      %p91 = scmp.eq.s32.totalorder %s27, 1
      %p92 = por %p90, %p91
      %p94 = scmp.ne.s32.totalorder %s79, %s93
      %p95 = scmp.eq.s32.totalorder %s27, 0
      %p96 = por %p94, %p95
      %s98 = sadd.s32 %s97, 1
      %p101 = scmp.eq.s32.totalorder %s21, 1
      %p102 = scmp.ne.s32.totalorder %s97, %s99
      %p103 = scmp.eq.s32.totalorder %s21, 0
      %p104 = por %p102, %p103
      %p105 = scmp.ne.s32.totalorder %s97, %s99
      %p106 = scmp.eq.s32.totalorder %s26, 1
      %p107 = por %p105, %p106
      %p108 = scmp.ne.s32.totalorder %s99, %s100
      %p109 = scmp.eq.s32.totalorder %s26, 0
      %p110 = por %p108, %p109
      %p111 = scmp.ne.s32.totalorder %s99, %s100
      %p112 = scmp.eq.s32.totalorder %s27, 1
      %p113 = por %p111, %p112
      %p115 = scmp.ne.s32.totalorder %s100, %s114
      %p116 = scmp.eq.s32.totalorder %s27, 0
      %p117 = por %p115, %p116
      %s118 = ssub.s32 %s21, %s28
      %p119 = scmp.eq.s32.totalorder %s118, 0
      %s121 = sadd.s32 %s120, 1
      %s122 = scalar_select %p119, %s120, %s121
      %p125 = pneg %p119
      %p126 = scmp.eq.s32.totalorder %s21, 1
      %p127 = por %p125, %p126
      %p128 = scmp.ne.s32.totalorder %s120, %s123
      %p129 = scmp.eq.s32.totalorder %s21, 0
      %p130 = por %p128, %p129
      %p131 = scmp.ne.s32.totalorder %s120, %s123
      %p132 = scmp.eq.s32.totalorder %s26, 1
      %p133 = por %p131, %p132
      %p134 = scmp.ne.s32.totalorder %s123, %s124
      %p135 = scmp.eq.s32.totalorder %s26, 0
      %p136 = por %p134, %p135
      %p137 = scmp.ne.s32.totalorder %s123, %s124
      %p138 = scmp.eq.s32.totalorder %s27, 1
      %p139 = por %p137, %p138
      %p141 = scmp.ne.s32.totalorder %s124, %s140
      %p142 = scmp.eq.s32.totalorder %s27, 0
      %p143 = por %p141, %p142
      %s144 = ssub.s32 %s21, %s28
      %p145 = scmp.eq.s32.totalorder %s144, 0
      %s147 = sadd.s32 %s146, 1
      %s148 = scalar_select %p145, %s146, %s147
      %p151 = pneg %p145
      %p152 = scmp.eq.s32.totalorder %s21, 1
      %p153 = por %p151, %p152
      %p154 = scmp.ne.s32.totalorder %s146, %s149
      %p155 = scmp.eq.s32.totalorder %s21, 0
      %p156 = por %p154, %p155
      %p157 = scmp.ne.s32.totalorder %s146, %s149
      %p158 = scmp.eq.s32.totalorder %s26, 1
      %p159 = por %p157, %p158
      %p160 = scmp.ne.s32.totalorder %s149, %s150
      %p161 = scmp.eq.s32.totalorder %s26, 0
      %p162 = por %p160, %p161
      %p163 = scmp.ne.s32.totalorder %s149, %s150
      %p164 = scmp.eq.s32.totalorder %s27, 1
      %p165 = por %p163, %p164
      %p167 = scmp.ne.s32.totalorder %s150, %s166
      %p168 = scmp.eq.s32.totalorder %s27, 0
      %p169 = por %p167, %p168
      %p170 = scmp.le.s32.totalorder 1, %s21
      %p171 = scmp.lt.s32.totalorder %s21, 3
      %p172 = pnand %p170, %p171
      %p173 = pneg %p172
      // Predicated region
      $region9: #{tpu_custom_call.1} parent=5 // pred_check
        _
      $region10: #{tpu_custom_call.1} parent=5 // pred_check_branch
        %175 = sbr.rel (%p172) target = $region12
      $region11: #{tpu_custom_call.1} parent=5 // pred_region
        %s176 = ssub.s32 %s21, 1
        // Predicated region
        $region13: #{tpu_custom_call.1} parent=11 // pred_check
          %p177 = pneg %p68
        $region14: #{tpu_custom_call.1} parent=11 // pred_check_branch
          %179 = sbr.rel (%p177) target = $region16
        $region15: #{tpu_custom_call.1} parent=11 // pred_region
          _
        $region16: #{tpu_custom_call.1} parent=11 // pred_fallthru
          _
        // Predicated region
        $region17: #{tpu_custom_call.1} parent=11 // pred_check
          %p180 = pneg %p89
        $region18: #{tpu_custom_call.1} parent=11 // pred_check_branch
          %182 = sbr.rel (%p180) target = $region20
        $region19: #{tpu_custom_call.1} parent=11 // pred_region
          _
        $region20: #{tpu_custom_call.1} parent=11 // pred_fallthru
          _
        // Predicated region
        $region21: #{tpu_custom_call.1} parent=11 // pred_check
          %p183 = pneg %p110
        $region22: #{tpu_custom_call.1} parent=11 // pred_check_branch
          %185 = sbr.rel (%p183) target = $region24
        $region23: #{tpu_custom_call.1} parent=11 // pred_region
          _
        $region24: #{tpu_custom_call.1} parent=11 // pred_fallthru
          _
      $region12: #{tpu_custom_call.1} parent=5 // pred_fallthru
        _
      %p186 = scmp.lt.s32.totalorder %s21, 2
      // Predicated region
      $region25: #{tpu_custom_call.1} parent=5 // pred_check
        %p187 = pneg %p186
      $region26: #{tpu_custom_call.1} parent=5 // pred_check_branch
        %189 = sbr.rel (%p187) target = $region28
      $region27: #{tpu_custom_call.1} parent=5 // pred_region
        // Predicated region
        $region29: #{tpu_custom_call.1} parent=27 // pred_check
          %p190 = pneg %p41
        $region30: #{tpu_custom_call.1} parent=27 // pred_check_branch
          %192 = sbr.rel (%p190) target = $region32
        $region31: #{tpu_custom_call.1} parent=27 // pred_region
          %s193 = sand.u32 %s31, 1
          %s194 = scalar_lea.sflag [#allocation3], %s193
          %s195 = sand.u32 %s31, 1
          %s196 = smul.addr %s195, 128
          %s197 = scalar_lea.vmem [#allocation2], %s196
          %199 = vsyncadd %s194, 0
          %s200 = smul.addr %s21, 16
          %s201 = smul.addr %s200, 8
          %s202 = scalar_lea.hbm %s0, %s201
          %s203 = sshll.u32 %s202, 4
          %s204 = int_to_ptr.hbm [resolvable:$true] %s203
          %s205 = sshll.u32 %s197, 4
          %s206 = int_to_ptr.vmem [resolvable:$true] %s205
          %211 = dma.hbm_to_vmem [thread:$0]  %s204, 2048, %s206, %s194, 128, 128, 8
        $region32: #{tpu_custom_call.1} parent=27 // pred_fallthru
          _
      $region28: #{tpu_custom_call.1} parent=5 // pred_fallthru
        _
      %p212 = scmp.le.s32.totalorder 1, %s21
      %p213 = scmp.lt.s32.totalorder %s21, 3
      %p214 = pnand %p212, %p213
      %p215 = pneg %p214
      // Predicated region
      $region33: #{tpu_custom_call.1} parent=5 // pred_check
        _
      $region34: #{tpu_custom_call.1} parent=5 // pred_check_branch
        %217 = sbr.rel (%p214) target = $region36
      $region35: #{tpu_custom_call.1} parent=5 // pred_region
        %s218 = ssub.s32 %s21, 1
        %s219 = sand.u32 %s34, 1
        %s220 = scalar_lea.sflag [#allocation3], %s219
        %s221 = sand.u32 %s34, 1
        %s222 = smul.addr %s221, 128
        %s223 = scalar_lea.vmem [#allocation2], %s222
        // Predicated region
        $region37: #{tpu_custom_call.1} parent=35 // pred_check
          %p224 = pneg %p47
        $region38: #{tpu_custom_call.1} parent=35 // pred_check_branch
          %226 = sbr.rel (%p224) target = $region40
        $region39: #{tpu_custom_call.1} parent=35 // pred_region
          %228 = dma.done %s220, 2048
        $region40: #{tpu_custom_call.1} parent=35 // pred_fallthru
          _
        %s229 = sand.u32 %s34, 1
        %s230 = scalar_lea.sflag [#allocation3], %s229
        %s231 = sand.u32 %s34, 1
        %s232 = smul.addr %s231, 128
        %s233 = scalar_lea.vmem [#allocation2], %s232
        %p234 = pneg %p47
        %p235 = pneg %p44
        %p236 = pneg %p68
        %p237 = pneg %p65
        %p238 = pneg %p89
        %p239 = pneg %p86
        %p240 = pneg %p110
        %p241 = pneg %p107
        %p242 = pneg %p136
        %p243 = pneg %p133
        %s244 = sand.u32 %s123, 1
        %s245 = scalar_lea.sflag [#allocation4], %s244
        %s246 = sand.u32 %s123, 1
        %s247 = scalar_lea.vmem [#allocation5], %s246
        %p248 = pneg %p162
        %p249 = pneg %p159
        %s250 = sand.u32 %s149, 1
        %s251 = scalar_lea.sflag [#allocation7], %s250
        %s252 = sand.u32 %s149, 1
        %s253 = scalar_lea.vmem [#allocation6], %s252
        %v254 = vld [vmem:[%s223] sm:$0xff]
        %v255 = vld [vmem:[%s223 + $0x8] sm:$0xff]
        %v256 = vld [vmem:[%s223 + $0x10] sm:$0xff]
        %v257 = vld [vmem:[%s223 + $0x18] sm:$0xff]
        %v258 = vld [vmem:[%s223 + $0x20] sm:$0xff]
        %v259 = vld [vmem:[%s223 + $0x28] sm:$0xff]
        %v260 = vld [vmem:[%s223 + $0x30] sm:$0xff]
        %v261 = vld [vmem:[%s223 + $0x38] sm:$0xff]
        %v262 = vld [vmem:[%s223 + $0x40] sm:$0xff]
        %v263 = vld [vmem:[%s223 + $0x48] sm:$0xff]
        %v264 = vld [vmem:[%s223 + $0x50] sm:$0xff]
        %v265 = vld [vmem:[%s223 + $0x58] sm:$0xff]
        %v266 = vld [vmem:[%s223 + $0x60] sm:$0xff]
        %v267 = vld [vmem:[%s223 + $0x68] sm:$0xff]
        %v268 = vld [vmem:[%s223 + $0x70] sm:$0xff]
        %v269 = vld [vmem:[%s223 + $0x78] sm:$0xff]
        %v270 = vld [vmem:[%s1] sm:$0xff]
        %v271 = vld [vmem:[%s1 + $0x8] sm:$0xff]
        %v272 = vld [vmem:[%s1 + $0x10] sm:$0xff]
        %v273 = vld [vmem:[%s1 + $0x18] sm:$0xff]
        %v274 = vld [vmem:[%s1 + $0x20] sm:$0xff]
        %v275 = vld [vmem:[%s1 + $0x28] sm:$0xff]
        %v276 = vld [vmem:[%s1 + $0x30] sm:$0xff]
        %v277 = vld [vmem:[%s1 + $0x38] sm:$0xff]
        %v278 = vld [vmem:[%s1 + $0x40] sm:$0xff]
        %v279 = vld [vmem:[%s1 + $0x48] sm:$0xff]
        %v280 = vld [vmem:[%s1 + $0x50] sm:$0xff]
        %v281 = vld [vmem:[%s1 + $0x58] sm:$0xff]
        %v282 = vld [vmem:[%s1 + $0x60] sm:$0xff]
        %v283 = vld [vmem:[%s1 + $0x68] sm:$0xff]
        %v284 = vld [vmem:[%s1 + $0x70] sm:$0xff]
        %v285 = vld [vmem:[%s1 + $0x78] sm:$0xff]
        %286 = vmatpush.msra.mxu0 %v269
        %287 = vmatpush.msra.mxu0 %v268
        %288 = vmatpush.msra.mxu0 %v267
        %289 = vmatpush.msra.mxu0 %v266
        %290 = vmatpush.msra.mxu0 %v265
        %291 = vmatpush.msra.mxu0 %v264
        %292 = vmatpush.msra.mxu0 %v263
        %293 = vmatpush.msra.mxu0 %v262
        %294 = vmatpush.msra.mxu0 %v261
        %295 = vmatpush.msra.mxu0 %v260
        %296 = vmatpush.msra.mxu0 %v259
        %297 = vmatpush.msra.mxu0 %v258
        %298 = vmatpush.msra.mxu0 %v257
        %299 = vmatpush.msra.mxu0 %v256
        %300 = vmatpush.msra.mxu0 %v255
        %301 = vmatpush.msra.mxu0 %v254
        %302 = vmatmul.f32.gmra.mxu0 1.0
        %v303 = vpop.f32.mrf.mxu0
        %v304 = vadd.f32 0.0, %v303
        %305 = vdwg.mxu0
        %306 = vmatpush.msra.mxu0 %v285
        %307 = vmatpush.msra.mxu0 %v284
        %308 = vmatpush.msra.mxu0 %v283
        %309 = vmatpush.msra.mxu0 %v282
        %310 = vmatpush.msra.mxu0 %v281
        %311 = vmatpush.msra.mxu0 %v280
        %312 = vmatpush.msra.mxu0 %v279
        %313 = vmatpush.msra.mxu0 %v278
        %314 = vmatpush.msra.mxu0 %v277
        %315 = vmatpush.msra.mxu0 %v276
        %316 = vmatpush.msra.mxu0 %v275
        %317 = vmatpush.msra.mxu0 %v274
        %318 = vmatpush.msra.mxu0 %v273
        %319 = vmatpush.msra.mxu0 %v272
        %320 = vmatpush.msra.mxu0 %v271
        %321 = vmatpush.msra.mxu0 %v270
        %322 = vmatmul.f32.gmra.mxu0 %v304
        %v323 = vpop.f32.mrf.mxu0
        %v324 = vadd.f32 0.0, %v323
        %325 = vdwg.mxu0
        %v326 = vmul.f32 %v324, 0.001953125
        %vm327 = vcmask 261120
        %v329 = vsel %vm327, %v326, 0
        %v332 = vsel %vm327, %v270, 0
        %v335 = vsel %vm327, %v271, 0
        %v338 = vsel %vm327, %v272, 0
        %v341 = vsel %vm327, %v273, 0
        %v344 = vsel %vm327, %v274, 0
        %v347 = vsel %vm327, %v275, 0
        %v350 = vsel %vm327, %v276, 0
        %v353 = vsel %vm327, %v277, 0
        %v356 = vsel %vm327, %v278, 0
        %v359 = vsel %vm327, %v279, 0
        %v362 = vsel %vm327, %v280, 0
        %v365 = vsel %vm327, %v281, 0
        %v368 = vsel %vm327, %v282, 0
        %v371 = vsel %vm327, %v283, 0
        %v374 = vsel %vm327, %v284, 0
        %v377 = vsel %vm327, %v285, 0
        %379 = vmatpush.xpose.msra.mxu0 %v377
        %380 = vmatpush.xpose.msra.mxu0 %v374
        %381 = vmatpush.xpose.msra.mxu0 %v371
        %382 = vmatpush.xpose.msra.mxu0 %v368
        %383 = vmatpush.xpose.msra.mxu0 %v365
        %384 = vmatpush.xpose.msra.mxu0 %v362
        %385 = vmatpush.xpose.msra.mxu0 %v359
        %386 = vmatpush.xpose.msra.mxu0 %v356
        %387 = vmatpush.xpose.msra.mxu0 %v353
        %388 = vmatpush.xpose.msra.mxu0 %v350
        %389 = vmatpush.xpose.msra.mxu0 %v347
        %390 = vmatpush.xpose.msra.mxu0 %v344
        %391 = vmatpush.xpose.msra.mxu0 %v341
        %392 = vmatpush.xpose.msra.mxu0 %v338
        %393 = vmatpush.xpose.msra.mxu0 %v335
        %394 = vmatpush.xpose.msra.mxu0 %v332
        %395 = vmatmul.f32.gmra.mxu0 %v329
        %v396 = vpop.f32.mrf.mxu0
        %v397 = vadd.f32 0.0, %v396
        %398 = vdwg.mxu0
        %v399 = vperm.slane %v397, 0
        %v400 = vsub.f32 %v254, %v399
        %v401 = vsub.f32 %v255, %v399
        %v402 = vsub.f32 %v256, %v399
        %v403 = vsub.f32 %v257, %v399
        %v404 = vsub.f32 %v258, %v399
        %v405 = vsub.f32 %v259, %v399
        %v406 = vsub.f32 %v260, %v399
        %v407 = vsub.f32 %v261, %v399
        %v408 = vsub.f32 %v262, %v399
        %v409 = vsub.f32 %v263, %v399
        %v410 = vsub.f32 %v264, %v399
        %v411 = vsub.f32 %v265, %v399
        %v412 = vsub.f32 %v266, %v399
        %v413 = vsub.f32 %v267, %v399
        %v414 = vsub.f32 %v268, %v399
        %v415 = vsub.f32 %v269, %v399
        %v416 = vmul.f32 %v400, %v400
        %v417 = vmul.f32 %v401, %v401
        %v418 = vmul.f32 %v402, %v402
        %v419 = vmul.f32 %v403, %v403
        %v420 = vmul.f32 %v404, %v404
        %v421 = vmul.f32 %v405, %v405
        %v422 = vmul.f32 %v406, %v406
        %v423 = vmul.f32 %v407, %v407
        %v424 = vmul.f32 %v408, %v408
        %v425 = vmul.f32 %v409, %v409
        %v426 = vmul.f32 %v410, %v410
        %v427 = vmul.f32 %v411, %v411
        %v428 = vmul.f32 %v412, %v412
        %v429 = vmul.f32 %v413, %v413
        %v430 = vmul.f32 %v414, %v414
        %v431 = vmul.f32 %v415, %v415
        %432 = vmatpush.msra.mxu0 %v431
        %433 = vmatpush.msra.mxu0 %v430
        %434 = vmatpush.msra.mxu0 %v429
        %435 = vmatpush.msra.mxu0 %v428
        %436 = vmatpush.msra.mxu0 %v427
        %437 = vmatpush.msra.mxu0 %v426
        %438 = vmatpush.msra.mxu0 %v425
        %439 = vmatpush.msra.mxu0 %v424
        %440 = vmatpush.msra.mxu0 %v423
        %441 = vmatpush.msra.mxu0 %v422
        %442 = vmatpush.msra.mxu0 %v421
        %443 = vmatpush.msra.mxu0 %v420
        %444 = vmatpush.msra.mxu0 %v419
        %445 = vmatpush.msra.mxu0 %v418
        %446 = vmatpush.msra.mxu0 %v417
        %447 = vmatpush.msra.mxu0 %v416
        %448 = vmatmul.f32.gmra.mxu0 1.0
        %v449 = vpop.f32.mrf.mxu0
        %v450 = vadd.f32 0.0, %v449
        %451 = vdwg.mxu0
        %452 = vmatpush.msra.mxu0 %v285
        %453 = vmatpush.msra.mxu0 %v284
        %454 = vmatpush.msra.mxu0 %v283
        %455 = vmatpush.msra.mxu0 %v282
        %456 = vmatpush.msra.mxu0 %v281
        %457 = vmatpush.msra.mxu0 %v280
        %458 = vmatpush.msra.mxu0 %v279
        %459 = vmatpush.msra.mxu0 %v278
        %460 = vmatpush.msra.mxu0 %v277
        %461 = vmatpush.msra.mxu0 %v276
        %462 = vmatpush.msra.mxu0 %v275
        %463 = vmatpush.msra.mxu0 %v274
        %464 = vmatpush.msra.mxu0 %v273
        %465 = vmatpush.msra.mxu0 %v272
        %466 = vmatpush.msra.mxu0 %v271
        %467 = vmatpush.msra.mxu0 %v270
        %468 = vmatmul.f32.gmra.mxu0 %v450
        %v469 = vpop.f32.mrf.mxu0
        %v470 = vadd.f32 0.0, %v469
        %471 = vdwg.mxu0
        %v472 = vmul.f32 %v470, 0.001953125
        %v473 = vadd.f32 %v472, 1e-06
        %v474 = vrsqrt.pop %v473
        %v475 = vmul.f32 %v474, %v473
        %v476 = vmul.f32 %v475, %v474
        %v477 = vmul.f32 0.5, %v476
        %v478 = vsub.f32 1.5, %v477
        %v479 = vmul.f32 %v474, %v478
        %vm480 = vweird.f32 %v473
        %vm481 = vweird.f32 %v474
        %vm482 = vmor %vm480, %vm481
        %v483 = vsel %vm482, %v474, %v479
        %v485 = vsel %vm327, %v483, 0
        %487 = vmatpush.xpose.msra.mxu0 %v377
        %488 = vmatpush.xpose.msra.mxu0 %v374
        %489 = vmatpush.xpose.msra.mxu0 %v371
        %490 = vmatpush.xpose.msra.mxu0 %v368
        %491 = vmatpush.xpose.msra.mxu0 %v365
        %492 = vmatpush.xpose.msra.mxu0 %v362
        %493 = vmatpush.xpose.msra.mxu0 %v359
        %494 = vmatpush.xpose.msra.mxu0 %v356
        %495 = vmatpush.xpose.msra.mxu0 %v353
        %496 = vmatpush.xpose.msra.mxu0 %v350
        %497 = vmatpush.xpose.msra.mxu0 %v347
        %498 = vmatpush.xpose.msra.mxu0 %v344
        %499 = vmatpush.xpose.msra.mxu0 %v341
        %500 = vmatpush.xpose.msra.mxu0 %v338
        %501 = vmatpush.xpose.msra.mxu0 %v335
        %502 = vmatpush.xpose.msra.mxu0 %v332
        %503 = vmatmul.f32.gmra.mxu0 %v485
        %v504 = vpop.f32.mrf.mxu0
        %v505 = vadd.f32 0.0, %v504
        %506 = vdwg.mxu0
        %v507 = vld [vmem:[%s2] sm:$0x1]
        %v508 = vmul.f32 %v505, %v507
        %509 = vst [vmem:[%s247] sm:$0x1] %v508
        %v510 = vld [vmem:[%s3] sm:$0x1]
        %v511 = vmul.f32 %v397, %v508
        %v512 = vsub.f32 %v510, %v511
        %513 = vst [vmem:[%s253] sm:$0x1] %v512
        %s514 = sand.u32 %s123, 1
        %s515 = scalar_lea.sflag [#allocation4], %s514
        %s516 = sand.u32 %s123, 1
        %s517 = scalar_lea.vmem [#allocation5], %s516
        %s518 = sand.u32 %s149, 1
        %s519 = scalar_lea.sflag [#allocation7], %s518
        %s520 = sand.u32 %s149, 1
        %s521 = scalar_lea.vmem [#allocation6], %s520
        // Predicated region
        $region41: #{tpu_custom_call.1} parent=35 // pred_check
          %p522 = pneg %p133
        $region42: #{tpu_custom_call.1} parent=35 // pred_check_branch
          %524 = sbr.rel (%p522) target = $region44
        $region43: #{tpu_custom_call.1} parent=35 // pred_region
          %526 = vsyncadd %s515, 0
          %s527 = scalar_lea.hbm %s4, %s26
          %s529 = sshll.u32 %s517, 4
          %s530 = int_to_ptr.vmem [resolvable:$true] %s529
          %s531 = sshll.u32 %s527, 4
          %s532 = int_to_ptr.hbm [resolvable:$true] %s531
          %534 = dma.vmem_to_hbm [thread:$0]  %s530, 16, %s532, %s515
        $region44: #{tpu_custom_call.1} parent=35 // pred_fallthru
          _
        // Predicated region
        $region45: #{tpu_custom_call.1} parent=35 // pred_check
          %p535 = pneg %p159
        $region46: #{tpu_custom_call.1} parent=35 // pred_check_branch
          %537 = sbr.rel (%p535) target = $region48
        $region47: #{tpu_custom_call.1} parent=35 // pred_region
          %539 = vsyncadd %s519, 0
          %s540 = scalar_lea.hbm %s5, %s26
          %s542 = sshll.u32 %s521, 4
          %s543 = int_to_ptr.vmem [resolvable:$true] %s542
          %s544 = sshll.u32 %s540, 4
          %s545 = int_to_ptr.hbm [resolvable:$true] %s544
          %547 = dma.vmem_to_hbm [thread:$0]  %s543, 16, %s545, %s519
        $region48: #{tpu_custom_call.1} parent=35 // pred_fallthru
          _
      $region36: #{tpu_custom_call.1} parent=5 // pred_fallthru
        _
      %p548 = scmp.le.s32.totalorder 2, %s21
      // Predicated region
      $region49: #{tpu_custom_call.1} parent=5 // pred_check
        %p549 = pneg %p548
      $region50: #{tpu_custom_call.1} parent=5 // pred_check_branch
        %551 = sbr.rel (%p549) target = $region52
      $region51: #{tpu_custom_call.1} parent=5 // pred_region
        %s552 = ssub.s32 %s21, 2
        // Predicated region
        $region53: #{tpu_custom_call.1} parent=51 // pred_check
          %p553 = pneg %p139
        $region54: #{tpu_custom_call.1} parent=51 // pred_check_branch
          %555 = sbr.rel (%p553) target = $region56
        $region55: #{tpu_custom_call.1} parent=51 // pred_region
          %s556 = sand.u32 %s124, 1
          %s557 = scalar_lea.sflag [#allocation4], %s556
          %s558 = sand.u32 %s124, 1
          %s559 = scalar_lea.vmem [#allocation5], %s558
          %561 = dma.done %s557, 16
        $region56: #{tpu_custom_call.1} parent=51 // pred_fallthru
          _
        // Predicated region
        $region57: #{tpu_custom_call.1} parent=51 // pred_check
          %p562 = pneg %p165
        $region58: #{tpu_custom_call.1} parent=51 // pred_check_branch
          %564 = sbr.rel (%p562) target = $region60
        $region59: #{tpu_custom_call.1} parent=51 // pred_region
          %s565 = sand.u32 %s150, 1
          %s566 = scalar_lea.sflag [#allocation7], %s565
          %s567 = sand.u32 %s150, 1
          %s568 = scalar_lea.vmem [#allocation6], %s567
          %570 = dma.done %s566, 16
        $region60: #{tpu_custom_call.1} parent=51 // pred_fallthru
          _
      $region52: #{tpu_custom_call.1} parent=5 // pred_fallthru
        _
    $region6: #{tpu_custom_call.1} parent=1 // loop_footer
      %s25 = sadd.s32 1, %s21
    $region7: #{tpu_custom_call.1} parent=1 // loop_footer_branch
      %20 = sbr.rel target = $region3
    $region8: #{tpu_custom_call.1} parent=1 // loop_exit
      _
    %571 = vsyncpa [#allocation3], 1
    %s572 = scalar_lea.sflag [#allocation3], 1
    %573 = vsyncpa %s572, 1
    %574 = vsyncpa [#allocation4], 1
    %s575 = scalar_lea.sflag [#allocation4], 1
    %576 = vsyncpa %s575, 1
    %577 = vsyncpa [#allocation7], 1
    %s578 = scalar_lea.sflag [#allocation7], 1
    %579 = vsyncpa %s578, 1

// kernel: tpu_custom_call.1
$region0: #{tpu_custom_call.1}
  #allocation0 [shape = 'u32[]', space=smem, size = 0x4, offset = 0x4, fixed_abs, tag = 'smem constant byte address 0x4 - core index']
  #allocation1 [shape = 'u32[72,128]{1,0:T(1,128)}', space=vmem, size = 0x9000, scoped, tag = 'internal scratch']
  %s0 = inlined_call_operand.hbm [shape: f32[2,128,128], index: 0, kind: input, shape index: {}]
  %s1 = inlined_call_operand.vmem [shape: f32[128,32], index: 1, kind: input, shape index: {}]
  %s2 = inlined_call_operand.vmem [shape: f32[1,128], index: 2, kind: input, shape index: {}]
  %s3 = inlined_call_operand.vmem [shape: f32[1,128], index: 3, kind: input, shape index: {}]
  %s4 = inlined_call_operand.hbm [shape: f32[2,1,128], index: 4, kind: output, shape index: {0}]
  %s5 = inlined_call_operand.hbm [shape: f32[2,1,128], index: 5, kind: output, shape index: {1}]
  %6 = xla_tuple %s4, %s5
  %s7 = sld [smem:[#allocation0]]
  $region61: #{tpu_custom_call.1} parent=0
    _
  %s9 = ssub.s32 1, %s7
  %s10 = scalar_select 0, %s9, %s7
  $region1: #{tpu_custom_call.1} parent=0
    #allocation2 [shape = 'u8[131072]{0}', space=vmem, size = 0x20000, scoped, tag = 'input window, operand 0']
    #allocation3 [shape = 's32[2]{0}', space=sflag, size = 0x8, scoped, tag = 'scoped memory for tpu_custom_call.1']
    #allocation4 [shape = 's32[2]{0}', space=sflag, size = 0x8, scoped, tag = 'scoped memory for tpu_custom_call.1']
    #allocation5 [shape = 'u8[1024]{0}', space=vmem, size = 0x400, scoped, tag = 'output window, operand 0']
    #allocation6 [shape = 'u8[1024]{0}', space=vmem, size = 0x400, scoped, tag = 'output window, operand 1']
    #allocation7 [shape = 's32[2]{0}', space=sflag, size = 0x8, scoped, tag = 'scoped memory for tpu_custom_call.1']
    %11 = vsyncpa [#allocation3], 0
    %s12 = scalar_lea.sflag [#allocation3], 1
    %13 = vsyncpa %s12, 0
    %14 = vsyncpa [#allocation4], 0
    %s15 = scalar_lea.sflag [#allocation4], 1
    %16 = vsyncpa %s15, 0
    %17 = vsyncpa [#allocation7], 0
    %s18 = scalar_lea.sflag [#allocation7], 1
    %19 = vsyncpa %s18, 0
    loop: start=0, step=1, limit=4
    $region2: #{tpu_custom_call.1} parent=1 // loop_pre_header
      _
    $region3: #{tpu_custom_call.1} parent=1 // loop_header
      %s21 = sphi 0, %s25
      %p22 = scmp.ge.s32.totalorder %s21, 4
      %s31 = sphi 0, %s33
      %s34 = sphi 0, %s31
      %s35 = sphi 0, %s34
      %s51 = sphi 0, %s35
      %s55 = sphi 0, %s55
      %s57 = sphi 0, %s55
      %s58 = sphi 0, %s57
      %s72 = sphi 0, %s58
      %s76 = sphi 0, %s76
      %s78 = sphi 0, %s76
      %s79 = sphi 0, %s78
      %s93 = sphi 0, %s79
      %s97 = sphi 0, %s97
      %s99 = sphi 0, %s97
      %s100 = sphi 0, %s99
      %s114 = sphi 0, %s100
      %s120 = sphi 0, %s122
      %s123 = sphi 0, %s120
      %s124 = sphi 0, %s123
      %s140 = sphi 0, %s124
      %s146 = sphi 0, %s148
      %s149 = sphi 0, %s146
      %s150 = sphi 0, %s149
      %s166 = sphi 0, %s150
    $region4: #{tpu_custom_call.1} parent=1 // loop_header_branch
      %24 = sbr.rel (%p22) target = $region8
    $region5: #{tpu_custom_call.1} parent=1 // loop_body
      %s26 = ssub.s32 %s21, 1
      %s27 = ssub.s32 %s21, 2
      %s28 = sadd.s32 %s21, 1
      %s29 = ssub.s32 %s21, %s28
      %p30 = scmp.eq.s32.totalorder %s29, 0
      %s32 = sadd.s32 %s31, 1
      %s33 = scalar_select %p30, %s31, %s32
      %p36 = pneg %p30
      %p37 = scmp.eq.s32.totalorder %s21, 1
      %p38 = por %p36, %p37
      %p39 = scmp.ne.s32.totalorder %s31, %s34
      %p40 = scmp.eq.s32.totalorder %s21, 0
      %p41 = por %p39, %p40
      %p42 = scmp.ne.s32.totalorder %s31, %s34
      %p43 = scmp.eq.s32.totalorder %s26, 1
      %p44 = por %p42, %p43
      %p45 = scmp.ne.s32.totalorder %s34, %s35
      %p46 = scmp.eq.s32.totalorder %s26, 0
      %p47 = por %p45, %p46
      %p48 = scmp.ne.s32.totalorder %s34, %s35
      %p49 = scmp.eq.s32.totalorder %s27, 1
      %p50 = por %p48, %p49
      %p52 = scmp.ne.s32.totalorder %s35, %s51
      %p53 = scmp.eq.s32.totalorder %s27, 0
      %p54 = por %p52, %p53
      %s56 = sadd.s32 %s55, 1
      %p59 = scmp.eq.s32.totalorder %s21, 1
      %p60 = scmp.ne.s32.totalorder %s55, %s57
      %p61 = scmp.eq.s32.totalorder %s21, 0
      %p62 = por %p60, %p61
      %p63 = scmp.ne.s32.totalorder %s55, %s57
      %p64 = scmp.eq.s32.totalorder %s26, 1
      %p65 = por %p63, %p64
      %p66 = scmp.ne.s32.totalorder %s57, %s58
      %p67 = scmp.eq.s32.totalorder %s26, 0
      %p68 = por %p66, %p67
      %p69 = scmp.ne.s32.totalorder %s57, %s58
      %p70 = scmp.eq.s32.totalorder %s27, 1
      %p71 = por %p69, %p70
      %p73 = scmp.ne.s32.totalorder %s58, %s72
      %p74 = scmp.eq.s32.totalorder %s27, 0
      %p75 = por %p73, %p74
      %s77 = sadd.s32 %s76, 1
      %p80 = scmp.eq.s32.totalorder %s21, 1
      %p81 = scmp.ne.s32.totalorder %s76, %s78
      %p82 = scmp.eq.s32.totalorder %s21, 0
      %p83 = por %p81, %p82
      %p84 = scmp.ne.s32.totalorder %s76, %s78
      %p85 = scmp.eq.s32.totalorder %s26, 1
      %p86 = por %p84, %p85
      %p87 = scmp.ne.s32.totalorder %s78, %s79
      %p88 = scmp.eq.s32.totalorder %s26, 0
      %p89 = por %p87, %p88
      %p90 = scmp.ne.s32.totalorder %s78, %s79
      %p91 = scmp.eq.s32.totalorder %s27, 1
      %p92 = por %p90, %p91
      %p94 = scmp.ne.s32.totalorder %s79, %s93
      %p95 = scmp.eq.s32.totalorder %s27, 0
      %p96 = por %p94, %p95
      %s98 = sadd.s32 %s97, 1
      %p101 = scmp.eq.s32.totalorder %s21, 1
      %p102 = scmp.ne.s32.totalorder %s97, %s99
      %p103 = scmp.eq.s32.totalorder %s21, 0
      %p104 = por %p102, %p103
      %p105 = scmp.ne.s32.totalorder %s97, %s99
      %p106 = scmp.eq.s32.totalorder %s26, 1
      %p107 = por %p105, %p106
      %p108 = scmp.ne.s32.totalorder %s99, %s100
      %p109 = scmp.eq.s32.totalorder %s26, 0
      %p110 = por %p108, %p109
      %p111 = scmp.ne.s32.totalorder %s99, %s100
      %p112 = scmp.eq.s32.totalorder %s27, 1
      %p113 = por %p111, %p112
      %p115 = scmp.ne.s32.totalorder %s100, %s114
      %p116 = scmp.eq.s32.totalorder %s27, 0
      %p117 = por %p115, %p116
      %s118 = ssub.s32 %s21, %s28
      %p119 = scmp.eq.s32.totalorder %s118, 0
      %s121 = sadd.s32 %s120, 1
      %s122 = scalar_select %p119, %s120, %s121
      %p125 = pneg %p119
      %p126 = scmp.eq.s32.totalorder %s21, 1
      %p127 = por %p125, %p126
      %p128 = scmp.ne.s32.totalorder %s120, %s123
      %p129 = scmp.eq.s32.totalorder %s21, 0
      %p130 = por %p128, %p129
      %p131 = scmp.ne.s32.totalorder %s120, %s123
      %p132 = scmp.eq.s32.totalorder %s26, 1
      %p133 = por %p131, %p132
      %p134 = scmp.ne.s32.totalorder %s123, %s124
      %p135 = scmp.eq.s32.totalorder %s26, 0
      %p136 = por %p134, %p135
      %p137 = scmp.ne.s32.totalorder %s123, %s124
      %p138 = scmp.eq.s32.totalorder %s27, 1
      %p139 = por %p137, %p138
      %p141 = scmp.ne.s32.totalorder %s124, %s140
      %p142 = scmp.eq.s32.totalorder %s27, 0
      %p143 = por %p141, %p142
      %s144 = ssub.s32 %s21, %s28
      %p145 = scmp.eq.s32.totalorder %s144, 0
      %s147 = sadd.s32 %s146, 1
      %s148 = scalar_select %p145, %s146, %s147
      %p151 = pneg %p145
      %p152 = scmp.eq.s32.totalorder %s21, 1
      %p153 = por %p151, %p152
      %p154 = scmp.ne.s32.totalorder %s146, %s149
      %p155 = scmp.eq.s32.totalorder %s21, 0
      %p156 = por %p154, %p155
      %p157 = scmp.ne.s32.totalorder %s146, %s149
      %p158 = scmp.eq.s32.totalorder %s26, 1
      %p159 = por %p157, %p158
      %p160 = scmp.ne.s32.totalorder %s149, %s150
      %p161 = scmp.eq.s32.totalorder %s26, 0
      %p162 = por %p160, %p161
      %p163 = scmp.ne.s32.totalorder %s149, %s150
      %p164 = scmp.eq.s32.totalorder %s27, 1
      %p165 = por %p163, %p164
      %p167 = scmp.ne.s32.totalorder %s150, %s166
      %p168 = scmp.eq.s32.totalorder %s27, 0
      %p169 = por %p167, %p168
      %p170 = scmp.le.s32.totalorder 1, %s21
      %p171 = scmp.lt.s32.totalorder %s21, 3
      %p172 = pnand %p170, %p171
      %p173 = pneg %p172
      // Predicated region
      $region9: #{tpu_custom_call.1} parent=5 // pred_check
        _
      $region10: #{tpu_custom_call.1} parent=5 // pred_check_branch
        %175 = sbr.rel (%p172) target = $region12
      $region11: #{tpu_custom_call.1} parent=5 // pred_region
        %s176 = ssub.s32 %s21, 1
        // Predicated region
        $region13: #{tpu_custom_call.1} parent=11 // pred_check
          %p177 = pneg %p68
        $region14: #{tpu_custom_call.1} parent=11 // pred_check_branch
          %179 = sbr.rel (%p177) target = $region16
        $region15: #{tpu_custom_call.1} parent=11 // pred_region
          _
        $region16: #{tpu_custom_call.1} parent=11 // pred_fallthru
          _
        // Predicated region
        $region17: #{tpu_custom_call.1} parent=11 // pred_check
          %p180 = pneg %p89
        $region18: #{tpu_custom_call.1} parent=11 // pred_check_branch
          %182 = sbr.rel (%p180) target = $region20
        $region19: #{tpu_custom_call.1} parent=11 // pred_region
          _
        $region20: #{tpu_custom_call.1} parent=11 // pred_fallthru
          _
        // Predicated region
        $region21: #{tpu_custom_call.1} parent=11 // pred_check
          %p183 = pneg %p110
        $region22: #{tpu_custom_call.1} parent=11 // pred_check_branch
          %185 = sbr.rel (%p183) target = $region24
        $region23: #{tpu_custom_call.1} parent=11 // pred_region
          _
        $region24: #{tpu_custom_call.1} parent=11 // pred_fallthru
          _
      $region12: #{tpu_custom_call.1} parent=5 // pred_fallthru
        _
      %p186 = scmp.lt.s32.totalorder %s21, 2
      // Predicated region
      $region25: #{tpu_custom_call.1} parent=5 // pred_check
        %p187 = pneg %p186
      $region26: #{tpu_custom_call.1} parent=5 // pred_check_branch
        %189 = sbr.rel (%p187) target = $region28
      $region27: #{tpu_custom_call.1} parent=5 // pred_region
        // Predicated region
        $region29: #{tpu_custom_call.1} parent=27 // pred_check
          %p190 = pneg %p41
        $region30: #{tpu_custom_call.1} parent=27 // pred_check_branch
          %192 = sbr.rel (%p190) target = $region32
        $region31: #{tpu_custom_call.1} parent=27 // pred_region
          %s193 = sand.u32 %s31, 1
          %s194 = scalar_lea.sflag [#allocation3], %s193
          %s195 = sand.u32 %s31, 1
          %s196 = smul.addr %s195, 128
          %s197 = scalar_lea.vmem [#allocation2], %s196
          %199 = vsyncadd %s194, 0
          %s200 = smul.addr %s21, 16
          %s201 = smul.addr %s200, 8
          %s202 = scalar_lea.hbm %s0, %s201
          %s203 = sshll.u32 %s202, 4
          %s204 = int_to_ptr.hbm [resolvable:$true] %s203
          %s205 = sshll.u32 %s197, 4
          %s206 = int_to_ptr.vmem [resolvable:$true] %s205
          %211 = dma.hbm_to_vmem [thread:$0]  %s204, 2048, %s206, %s194, 128, 128, 8
        $region32: #{tpu_custom_call.1} parent=27 // pred_fallthru
          _
      $region28: #{tpu_custom_call.1} parent=5 // pred_fallthru
        _
      %p212 = scmp.le.s32.totalorder 1, %s21
      %p213 = scmp.lt.s32.totalorder %s21, 3
      %p214 = pnand %p212, %p213
      %p215 = pneg %p214
      // Predicated region
      $region33: #{tpu_custom_call.1} parent=5 // pred_check
        _
      $region34: #{tpu_custom_call.1} parent=5 // pred_check_branch
        %217 = sbr.rel (%p214) target = $region36
      $region35: #{tpu_custom_call.1} parent=5 // pred_region
        %s218 = ssub.s32 %s21, 1
        %s219 = sand.u32 %s34, 1
        %s220 = scalar_lea.sflag [#allocation3], %s219
        %s221 = sand.u32 %s34, 1
        %s222 = smul.addr %s221, 128
        %s223 = scalar_lea.vmem [#allocation2], %s222
        // Predicated region
        $region37: #{tpu_custom_call.1} parent=35 // pred_check
          %p224 = pneg %p47
        $region38: #{tpu_custom_call.1} parent=35 // pred_check_branch
          %226 = sbr.rel (%p224) target = $region40
        $region39: #{tpu_custom_call.1} parent=35 // pred_region
          %228 = dma.done %s220, 2048
        $region40: #{tpu_custom_call.1} parent=35 // pred_fallthru
          _
        %s229 = sand.u32 %s34, 1
        %s230 = scalar_lea.sflag [#allocation3], %s229
        %s231 = sand.u32 %s34, 1
        %s232 = smul.addr %s231, 128
        %s233 = scalar_lea.vmem [#allocation2], %s232
        %p234 = pneg %p47
        %p235 = pneg %p44
        %p236 = pneg %p68
        %p237 = pneg %p65
        %p238 = pneg %p89
        %p239 = pneg %p86
        %p240 = pneg %p110
        %p241 = pneg %p107
        %p242 = pneg %p136
        %p243 = pneg %p133
        %s244 = sand.u32 %s123, 1
        %s245 = scalar_lea.sflag [#allocation4], %s244
        %s246 = sand.u32 %s123, 1
        %s247 = scalar_lea.vmem [#allocation5], %s246
        %p248 = pneg %p162
        %p249 = pneg %p159
        %s250 = sand.u32 %s149, 1
        %s251 = scalar_lea.sflag [#allocation7], %s250
        %s252 = sand.u32 %s149, 1
        %s253 = scalar_lea.vmem [#allocation6], %s252
        %v254 = vld [vmem:[%s223] sm:$0xff]
        %v255 = vld [vmem:[%s223 + $0x8] sm:$0xff]
        %v256 = vld [vmem:[%s223 + $0x10] sm:$0xff]
        %v257 = vld [vmem:[%s223 + $0x18] sm:$0xff]
        %v258 = vld [vmem:[%s223 + $0x20] sm:$0xff]
        %v259 = vld [vmem:[%s223 + $0x28] sm:$0xff]
        %v260 = vld [vmem:[%s223 + $0x30] sm:$0xff]
        %v261 = vld [vmem:[%s223 + $0x38] sm:$0xff]
        %v262 = vld [vmem:[%s223 + $0x40] sm:$0xff]
        %v263 = vld [vmem:[%s223 + $0x48] sm:$0xff]
        %v264 = vld [vmem:[%s223 + $0x50] sm:$0xff]
        %v265 = vld [vmem:[%s223 + $0x58] sm:$0xff]
        %v266 = vld [vmem:[%s223 + $0x60] sm:$0xff]
        %v267 = vld [vmem:[%s223 + $0x68] sm:$0xff]
        %v268 = vld [vmem:[%s223 + $0x70] sm:$0xff]
        %v269 = vld [vmem:[%s223 + $0x78] sm:$0xff]
        %v270 = vld [vmem:[%s1] sm:$0xff]
        %v271 = vld [vmem:[%s1 + $0x8] sm:$0xff]
        %v272 = vld [vmem:[%s1 + $0x10] sm:$0xff]
        %v273 = vld [vmem:[%s1 + $0x18] sm:$0xff]
        %v274 = vld [vmem:[%s1 + $0x20] sm:$0xff]
        %v275 = vld [vmem:[%s1 + $0x28] sm:$0xff]
        %v276 = vld [vmem:[%s1 + $0x30] sm:$0xff]
        %v277 = vld [vmem:[%s1 + $0x38] sm:$0xff]
        %v278 = vld [vmem:[%s1 + $0x40] sm:$0xff]
        %v279 = vld [vmem:[%s1 + $0x48] sm:$0xff]
        %v280 = vld [vmem:[%s1 + $0x50] sm:$0xff]
        %v281 = vld [vmem:[%s1 + $0x58] sm:$0xff]
        %v282 = vld [vmem:[%s1 + $0x60] sm:$0xff]
        %v283 = vld [vmem:[%s1 + $0x68] sm:$0xff]
        %v284 = vld [vmem:[%s1 + $0x70] sm:$0xff]
        %v285 = vld [vmem:[%s1 + $0x78] sm:$0xff]
        %286 = vmatpush.msra.mxu0 %v269
        %287 = vmatpush.msra.mxu0 %v268
        %288 = vmatpush.msra.mxu0 %v267
        %289 = vmatpush.msra.mxu0 %v266
        %290 = vmatpush.msra.mxu0 %v265
        %291 = vmatpush.msra.mxu0 %v264
        %292 = vmatpush.msra.mxu0 %v263
        %293 = vmatpush.msra.mxu0 %v262
        %294 = vmatpush.msra.mxu0 %v261
        %295 = vmatpush.msra.mxu0 %v260
        %296 = vmatpush.msra.mxu0 %v259
        %297 = vmatpush.msra.mxu0 %v258
        %298 = vmatpush.msra.mxu0 %v257
        %299 = vmatpush.msra.mxu0 %v256
        %300 = vmatpush.msra.mxu0 %v255
        %301 = vmatpush.msra.mxu0 %v254
        %302 = vmatmul.f32.gmra.mxu0 1.0
        %v303 = vpop.f32.mrf.mxu0
        %v304 = vadd.f32 0.0, %v303
        %305 = vdwg.mxu0
        %306 = vmatpush.msra.mxu0 %v285
        %307 = vmatpush.msra.mxu0 %v284
        %308 = vmatpush.msra.mxu0 %v283
        %309 = vmatpush.msra.mxu0 %v282
        %310 = vmatpush.msra.mxu0 %v281
        %311 = vmatpush.msra.mxu0 %v280
        %312 = vmatpush.msra.mxu0 %v279
        %313 = vmatpush.msra.mxu0 %v278
        %314 = vmatpush.msra.mxu0 %v277
        %315 = vmatpush.msra.mxu0 %v276
        %316 = vmatpush.msra.mxu0 %v275
        %317 = vmatpush.msra.mxu0 %v274
        %318 = vmatpush.msra.mxu0 %v273
        %319 = vmatpush.msra.mxu0 %v272
        %320 = vmatpush.msra.mxu0 %v271
        %321 = vmatpush.msra.mxu0 %v270
        %322 = vmatmul.f32.gmra.mxu0 %v304
        %v323 = vpop.f32.mrf.mxu0
        %v324 = vadd.f32 0.0, %v323
        %325 = vdwg.mxu0
        %v326 = vmul.f32 %v324, 0.001953125
        %vm327 = vcmask 261120
        %v329 = vsel %vm327, %v326, 0
        %v332 = vsel %vm327, %v270, 0
        %v335 = vsel %vm327, %v271, 0
        %v338 = vsel %vm327, %v272, 0
        %v341 = vsel %vm327, %v273, 0
        %v344 = vsel %vm327, %v274, 0
        %v347 = vsel %vm327, %v275, 0
        %v350 = vsel %vm327, %v276, 0
        %v353 = vsel %vm327, %v277, 0
        %v356 = vsel %vm327, %v278, 0
        %v359 = vsel %vm327, %v279, 0
        %v362 = vsel %vm327, %v280, 0
        %v365 = vsel %vm327, %v281, 0
        %v368 = vsel %vm327, %v282, 0
        %v371 = vsel %vm327, %v283, 0
        %v374 = vsel %vm327, %v284, 0
        %v377 = vsel %vm327, %v285, 0
        %379 = vmatpush.xpose.msra.mxu0 %v377
        %380 = vmatpush.xpose.msra.mxu0 %v374
        %381 = vmatpush.xpose.msra.mxu0 %v371
        %382 = vmatpush.xpose.msra.mxu0 %v368
        %383 = vmatpush.xpose.msra.mxu0 %v365
        %384 = vmatpush.xpose.msra.mxu0 %v362
        %385 = vmatpush.xpose.msra.mxu0 %v359
        %386 = vmatpush.xpose.msra.mxu0 %v356
        %387 = vmatpush.xpose.msra.mxu0 %v353
        %388 = vmatpush.xpose.msra.mxu0 %v350
        %389 = vmatpush.xpose.msra.mxu0 %v347
        %390 = vmatpush.xpose.msra.mxu0 %v344
        %391 = vmatpush.xpose.msra.mxu0 %v341
        %392 = vmatpush.xpose.msra.mxu0 %v338
        %393 = vmatpush.xpose.msra.mxu0 %v335
        %394 = vmatpush.xpose.msra.mxu0 %v332
        %395 = vmatmul.f32.gmra.mxu0 %v329
        %v396 = vpop.f32.mrf.mxu0
        %v397 = vadd.f32 0.0, %v396
        %398 = vdwg.mxu0
        %v399 = vperm.slane %v397, 0
        %v400 = vsub.f32 %v254, %v399
        %v401 = vsub.f32 %v255, %v399
        %v402 = vsub.f32 %v256, %v399
        %v403 = vsub.f32 %v257, %v399
        %v404 = vsub.f32 %v258, %v399
        %v405 = vsub.f32 %v259, %v399
        %v406 = vsub.f32 %v260, %v399
        %v407 = vsub.f32 %v261, %v399
        %v408 = vsub.f32 %v262, %v399
        %v409 = vsub.f32 %v263, %v399
        %v410 = vsub.f32 %v264, %v399
        %v411 = vsub.f32 %v265, %v399
        %v412 = vsub.f32 %v266, %v399
        %v413 = vsub.f32 %v267, %v399
        %v414 = vsub.f32 %v268, %v399
        %v415 = vsub.f32 %v269, %v399
        %v416 = vmul.f32 %v400, %v400
        %v417 = vmul.f32 %v401, %v401
        %v418 = vmul.f32 %v402, %v402
        %v419 = vmul.f32 %v403, %v403
        %v420 = vmul.f32 %v404, %v404
        %v421 = vmul.f32 %v405, %v405
        %v422 = vmul.f32 %v406, %v406
        %v423 = vmul.f32 %v407, %v407
        %v424 = vmul.f32 %v408, %v408
        %v425 = vmul.f32 %v409, %v409
        %v426 = vmul.f32 %v410, %v410
        %v427 = vmul.f32 %v411, %v411
        %v428 = vmul.f32 %v412, %v412
        %v429 = vmul.f32 %v413, %v413
        %v430 = vmul.f32 %v414, %v414
        %v431 = vmul.f32 %v415, %v415
        %432 = vmatpush.msra.mxu0 %v431
        %433 = vmatpush.msra.mxu0 %v430
        %434 = vmatpush.msra.mxu0 %v429
        %435 = vmatpush.msra.mxu0 %v428
        %436 = vmatpush.msra.mxu0 %v427
        %437 = vmatpush.msra.mxu0 %v426
        %438 = vmatpush.msra.mxu0 %v425
        %439 = vmatpush.msra.mxu0 %v424
        %440 = vmatpush.msra.mxu0 %v423
        %441 = vmatpush.msra.mxu0 %v422
        %442 = vmatpush.msra.mxu0 %v421
        %443 = vmatpush.msra.mxu0 %v420
        %444 = vmatpush.msra.mxu0 %v419
        %445 = vmatpush.msra.mxu0 %v418
        %446 = vmatpush.msra.mxu0 %v417
        %447 = vmatpush.msra.mxu0 %v416
        %448 = vmatmul.f32.gmra.mxu0 1.0
        %v449 = vpop.f32.mrf.mxu0
        %v450 = vadd.f32 0.0, %v449
        %451 = vdwg.mxu0
        %452 = vmatpush.msra.mxu0 %v285
        %453 = vmatpush.msra.mxu0 %v284
        %454 = vmatpush.msra.mxu0 %v283
        %455 = vmatpush.msra.mxu0 %v282
        %456 = vmatpush.msra.mxu0 %v281
        %457 = vmatpush.msra.mxu0 %v280
        %458 = vmatpush.msra.mxu0 %v279
        %459 = vmatpush.msra.mxu0 %v278
        %460 = vmatpush.msra.mxu0 %v277
        %461 = vmatpush.msra.mxu0 %v276
        %462 = vmatpush.msra.mxu0 %v275
        %463 = vmatpush.msra.mxu0 %v274
        %464 = vmatpush.msra.mxu0 %v273
        %465 = vmatpush.msra.mxu0 %v272
        %466 = vmatpush.msra.mxu0 %v271
        %467 = vmatpush.msra.mxu0 %v270
        %468 = vmatmul.f32.gmra.mxu0 %v450
        %v469 = vpop.f32.mrf.mxu0
        %v470 = vadd.f32 0.0, %v469
        %471 = vdwg.mxu0
        %v472 = vmul.f32 %v470, 0.001953125
        %v473 = vadd.f32 %v472, 1e-06
        %v474 = vrsqrt.pop %v473
        %v475 = vmul.f32 %v474, %v473
        %v476 = vmul.f32 %v475, %v474
        %v477 = vmul.f32 0.5, %v476
        %v478 = vsub.f32 1.5, %v477
        %v479 = vmul.f32 %v474, %v478
        %vm480 = vweird.f32 %v473
        %vm481 = vweird.f32 %v474
        %vm482 = vmor %vm480, %vm481
        %v483 = vsel %vm482, %v474, %v479
        %v485 = vsel %vm327, %v483, 0
        %487 = vmatpush.xpose.msra.mxu0 %v377
        %488 = vmatpush.xpose.msra.mxu0 %v374
        %489 = vmatpush.xpose.msra.mxu0 %v371
        %490 = vmatpush.xpose.msra.mxu0 %v368
        %491 = vmatpush.xpose.msra.mxu0 %v365
        %492 = vmatpush.xpose.msra.mxu0 %v362
        %493 = vmatpush.xpose.msra.mxu0 %v359
        %494 = vmatpush.xpose.msra.mxu0 %v356
        %495 = vmatpush.xpose.msra.mxu0 %v353
        %496 = vmatpush.xpose.msra.mxu0 %v350
        %497 = vmatpush.xpose.msra.mxu0 %v347
        %498 = vmatpush.xpose.msra.mxu0 %v344
        %499 = vmatpush.xpose.msra.mxu0 %v341
        %500 = vmatpush.xpose.msra.mxu0 %v338
        %501 = vmatpush.xpose.msra.mxu0 %v335
        %502 = vmatpush.xpose.msra.mxu0 %v332
        %503 = vmatmul.f32.gmra.mxu0 %v485
        %v504 = vpop.f32.mrf.mxu0
        %v505 = vadd.f32 0.0, %v504
        %506 = vdwg.mxu0
        %v507 = vld [vmem:[%s2] sm:$0x1]
        %v508 = vmul.f32 %v505, %v507
        %509 = vst [vmem:[%s247] sm:$0x1] %v508
        %v510 = vld [vmem:[%s3] sm:$0x1]
        %v511 = vmul.f32 %v397, %v508
        %v512 = vsub.f32 %v510, %v511
        %513 = vst [vmem:[%s253] sm:$0x1] %v512
        %s514 = sand.u32 %s123, 1
        %s515 = scalar_lea.sflag [#allocation4], %s514
        %s516 = sand.u32 %s123, 1
        %s517 = scalar_lea.vmem [#allocation5], %s516
        %s518 = sand.u32 %s149, 1
        %s519 = scalar_lea.sflag [#allocation7], %s518
        %s520 = sand.u32 %s149, 1
        %s521 = scalar_lea.vmem [#allocation6], %s520
        // Predicated region
        $region41: #{tpu_custom_call.1} parent=35 // pred_check
          %p522 = pneg %p133
        $region42: #{tpu_custom_call.1} parent=35 // pred_check_branch
          %524 = sbr.rel (%p522) target = $region44
        $region43: #{tpu_custom_call.1} parent=35 // pred_region
          %526 = vsyncadd %s515, 0
          %s527 = scalar_lea.hbm %s4, %s26
          %s529 = sshll.u32 %s517, 4
          %s530 = int_to_ptr.vmem [resolvable:$true] %s529
          %s531 = sshll.u32 %s527, 4
          %s532 = int_to_ptr.hbm [resolvable:$true] %s531
          %534 = dma.vmem_to_hbm [thread:$0]  %s530, 16, %s532, %s515
        $region44: #{tpu_custom_call.1} parent=35 // pred_fallthru
          _
        // Predicated region
        $region45: #{tpu_custom_call.1} parent=35 // pred_check
          %p535 = pneg %p159
        $region46: #{tpu_custom_call.1} parent=35 // pred_check_branch
          %537 = sbr.rel (%p535) target = $region48
        $region47: #{tpu_custom_call.1} parent=35 // pred_region
          %539 = vsyncadd %s519, 0
          %s540 = scalar_lea.hbm %s5, %s26
          %s542 = sshll.u32 %s521, 4
          %s543 = int_to_ptr.vmem [resolvable:$true] %s542
          %s544 = sshll.u32 %s540, 4
          %s545 = int_to_ptr.hbm [resolvable:$true] %s544
          %547 = dma.vmem_to_hbm [thread:$0]  %s543, 16, %s545, %s519
        $region48: #{tpu_custom_call.1} parent=35 // pred_fallthru
          _
      $region36: #{tpu_custom_call.1} parent=5 // pred_fallthru
        _
      %p548 = scmp.le.s32.totalorder 2, %s21
      // Predicated region
      $region49: #{tpu_custom_call.1} parent=5 // pred_check
        %p549 = pneg %p548
      $region50: #{tpu_custom_call.1} parent=5 // pred_check_branch
        %551 = sbr.rel (%p549) target = $region52
      $region51: #{tpu_custom_call.1} parent=5 // pred_region
        %s552 = ssub.s32 %s21, 2
        // Predicated region
        $region53: #{tpu_custom_call.1} parent=51 // pred_check
          %p553 = pneg %p139
        $region54: #{tpu_custom_call.1} parent=51 // pred_check_branch
          %555 = sbr.rel (%p553) target = $region56
        $region55: #{tpu_custom_call.1} parent=51 // pred_region
          %s556 = sand.u32 %s124, 1
          %s557 = scalar_lea.sflag [#allocation4], %s556
          %s558 = sand.u32 %s124, 1
          %s559 = scalar_lea.vmem [#allocation5], %s558
          %561 = dma.done %s557, 16
        $region56: #{tpu_custom_call.1} parent=51 // pred_fallthru
          _
        // Predicated region
        $region57: #{tpu_custom_call.1} parent=51 // pred_check
          %p562 = pneg %p165
        $region58: #{tpu_custom_call.1} parent=51 // pred_check_branch
          %564 = sbr.rel (%p562) target = $region60
        $region59: #{tpu_custom_call.1} parent=51 // pred_region
          %s565 = sand.u32 %s150, 1
          %s566 = scalar_lea.sflag [#allocation7], %s565
          %s567 = sand.u32 %s150, 1
          %s568 = scalar_lea.vmem [#allocation6], %s567
          %570 = dma.done %s566, 16
        $region60: #{tpu_custom_call.1} parent=51 // pred_fallthru
          _
      $region52: #{tpu_custom_call.1} parent=5 // pred_fallthru
        _
    $region6: #{tpu_custom_call.1} parent=1 // loop_footer
      %s25 = sadd.s32 1, %s21
    $region7: #{tpu_custom_call.1} parent=1 // loop_footer_branch
      %20 = sbr.rel target = $region3
    $region8: #{tpu_custom_call.1} parent=1 // loop_exit
      _
    %571 = vsyncpa [#allocation3], 1
    %s572 = scalar_lea.sflag [#allocation3], 1
    %573 = vsyncpa %s572, 1
    %574 = vsyncpa [#allocation4], 1
    %s575 = scalar_lea.sflag [#allocation4], 1
    %576 = vsyncpa %s575, 1
    %577 = vsyncpa [#allocation7], 1
    %s578 = scalar_lea.sflag [#allocation7], 1
    %579 = vsyncpa %s578, 1

</llo_original>
